<compile_context>
chip_gen: v5e
topology: v5e:2x2
jax: 0.10.0
libtpu: 0.0.40
codegen_flags: <defaults>
</compile_context>

<pallas_src>
import functools
import math

import jax
import jax.numpy as jnp
from jax import lax
from jax.experimental import pallas as pl
from jax.experimental.pallas import tpu as pltpu

MASK_VALUE = -1000000.0
LN_EPS = 1e-5


def _layernorm(x, w, b):
    # x: (T, C) f32, w/b: (1, C) f32
    mu = jnp.mean(x, axis=-1, keepdims=True)
    var = jnp.mean((x - mu) ** 2, axis=-1, keepdims=True)
    return (x - mu) * lax.rsqrt(var + LN_EPS) * w + b


def _gelu_exact(x):
    # matches torch.nn.GELU() (erf formulation)
    return 0.5 * x * (1.0 + lax.erf(x * (1.0 / math.sqrt(2.0))))


def block_kernel(xq_ref, xf_ref, amask_ref, vmask_ref,
                 ln1w_ref, ln1b_ref,
                 wq_ref, bq_ref, wkv_ref, bkv_ref,
                 wo_ref, bo_ref,
                 ln2w_ref, ln2b_ref,
                 w1_ref, b1_ref, w2_ref, b2_ref,
                 o_ref, *, n_head, ff_block):
    f32 = jnp.float32
    bf16 = jnp.bfloat16

    xq = xq_ref[0]                          # (TQ, C) residual-stream tile (f32)
    TQ, C = xq.shape
    hd = C // n_head
    scale = 1.0 / math.sqrt(hd)

    # ---- ln1 (f32 stats), bf16 MXU inputs / f32 accumulation ----
    xqn = _layernorm(xq, ln1w_ref[...], ln1b_ref[...]).astype(bf16)
    xfn = _layernorm(xf_ref[0], ln1w_ref[...], ln1b_ref[...]).astype(bf16)

    q = jnp.dot(xqn, wq_ref[...], preferred_element_type=f32) + bq_ref[...]     # (TQ, C)
    kv = jnp.dot(xfn, wkv_ref[...], preferred_element_type=f32) + bkv_ref[...]  # (T, 2C)

    qd = q.astype(bf16)
    kd = kv[:, :C].astype(bf16)
    vd = kv[:, C:].astype(bf16)

    # Combined mask, hoisted out of the head loop (exact masked_fill semantics).
    keep = jnp.logical_and(amask_ref[0] != 0.0, vmask_ref[0] != 0.0)   # (TQ, T)

    # Per-head attention; accumulate the output projection per head into one
    # lane-dense (TQ, C) f32 buffer (no concatenate, no explicit K transpose).
    y = jnp.zeros((TQ, C), f32)
    for h in range(n_head):
        sl = slice(h * hd, (h + 1) * hd)
        att = lax.dot_general(qd[:, sl], kd[:, sl],
                              dimension_numbers=(((1,), (1,)), ((), ())),
                              preferred_element_type=f32)               # (TQ, T)
        att = jnp.where(keep, att * scale, MASK_VALUE)
        m = jnp.max(att, axis=-1, keepdims=True)
        e = jnp.exp(att - m)
        p = e * pl.reciprocal(jnp.sum(e, axis=-1, keepdims=True), approx=True)
        av = jnp.dot(p.astype(bf16), vd[:, sl], preferred_element_type=f32)      # (TQ, hd)
        y = y + jnp.dot(av.astype(bf16), wo_ref[sl, :], preferred_element_type=f32)

    x = xq + y + bo_ref[...]                # residual 1

    # ---- ln2 + MLP, tiled over n_ff so the (TQ, n_ff) intermediate never exists ----
    xn2 = _layernorm(x, ln2w_ref[...], ln2b_ref[...]).astype(bf16)
    n_ff = w1_ref.shape[1]
    hout = jnp.zeros((TQ, C), f32)
    for j in range(0, n_ff, ff_block):
        h_mid = jnp.dot(xn2, w1_ref[:, j:j + ff_block], preferred_element_type=f32)
        h_mid = _gelu_exact(h_mid + b1_ref[:, j:j + ff_block])
        hout = hout + jnp.dot(h_mid.astype(bf16), w2_ref[j:j + ff_block, :],
                              preferred_element_type=f32)

    o_ref[0] = (x + hout + b2_ref[...]).astype(o_ref.dtype)   # residual 2


def transformer_block(x, attn_mask, valid_mask, params, n_head,
                      tq=None, ff_block=None):
    B, T, C = x.shape
    n_ff = params["w1"].shape[1]
    if tq is None:
        tq = T if T <= 256 else 256
    assert T % tq == 0
    if ff_block is None:
        ff_block = n_ff if n_ff <= 512 else 512
    assert n_ff % ff_block == 0

    f32, bf16 = jnp.float32, jnp.bfloat16
    amask = attn_mask.astype(f32)
    vmask3 = valid_mask.astype(f32).reshape(B, 1, T)

    # Fuse K/V weights into one (C, 2C) matmul; store matmul weights in bf16
    # (halves weight HBM->VMEM DMA and feeds the MXU bf16 path).
    wq = params["wq"].astype(bf16)
    wkv = jnp.concatenate([params["wk"], params["wv"]], axis=1).astype(bf16)
    bq = params["bq"].astype(f32)
    bkv = jnp.concatenate([params["bk"], params["bv"]], axis=1).astype(f32)
    wo = params["wo"].astype(bf16)
    w1 = params["w1"].astype(bf16)
    w2 = params["w2"].astype(bf16)

    def const(shape):
        return pl.BlockSpec(shape, lambda b, qi, _s=shape: tuple(0 for _ in _s))

    in_specs = [
        pl.BlockSpec((1, tq, C), lambda b, qi: (b, qi, 0)),   # x (query tile)
        pl.BlockSpec((1, T, C), lambda b, qi: (b, 0, 0)),     # x (full seq, for K/V)
        pl.BlockSpec((1, tq, T), lambda b, qi: (b, qi, 0)),   # attn_mask rows
        pl.BlockSpec((1, 1, T), lambda b, qi: (b, 0, 0)),     # valid_input_mask
        const((1, C)), const((1, C)),                         # ln1 w/b
        const((C, C)), const((1, C)),                         # Wq, bq
        const((C, 2 * C)), const((1, 2 * C)),                 # Wkv, bkv
        const((C, C)), const((1, C)),                         # Wo, bo
        const((1, C)), const((1, C)),                         # ln2 w/b
        const((C, n_ff)), const((1, n_ff)),                   # W1, b1
        const((n_ff, C)), const((1, C)),                      # W2, b2
    ]

    kernel = functools.partial(block_kernel, n_head=n_head, ff_block=ff_block)
    return pl.pallas_call(
        kernel,
        out_shape=jax.ShapeDtypeStruct((B, T, C), x.dtype),
        grid=(B, T // tq),
        in_specs=in_specs,
        out_specs=pl.BlockSpec((1, tq, C), lambda b, qi: (b, qi, 0)),
        compiler_params=pltpu.CompilerParams(
            dimension_semantics=("parallel", "parallel")),
    )(x, x, amask, vmask3,
      params["ln1w"], params["ln1b"],
      wq, bq, wkv, bkv, wo, params["bo"],
      params["ln2w"], params["ln2b"],
      w1, params["b1"], w2, params["b2"])


def ref_block(x, amask, vmask, p, n_head):
    """Pure-JAX f32 reference reproducing the PyTorch forward (eval mode)."""
    def ln(z, w, b):
        mu = z.mean(-1, keepdims=True)
        var = ((z - mu) ** 2).mean(-1, keepdims=True)
        return (z - mu) / jnp.sqrt(var + LN_EPS) * w + b

    B, T, C = x.shape
    hd = C // n_head
    xn = ln(x, p["ln1w"][0], p["ln1b"][0])
    q = xn @ p["wq"] + p["bq"][0]
    k = xn @ p["wk"] + p["bk"][0]
    v = xn @ p["wv"] + p["bv"][0]
    q = q.reshape(B, T, n_head, hd).transpose(0, 2, 1, 3)
    k = k.reshape(B, T, n_head, hd).transpose(0, 2, 1, 3)
    v = v.reshape(B, T, n_head, hd).transpose(0, 2, 1, 3)
    att = (q @ k.transpose(0, 1, 3, 2)) * (1.0 / math.sqrt(hd))
    att = jnp.where(amask[:, None] == 0, MASK_VALUE, att)
    att = jnp.where(vmask[:, None, None, :] == 0, MASK_VALUE, att)
    att = jax.nn.softmax(att, -1)
    y = (att @ v).transpose(0, 2, 1, 3).reshape(B, T, C)
    y = y @ p["wo"] + p["bo"][0]
    x = x + y
    xn2 = ln(x, p["ln2w"][0], p["ln2b"][0])
    h = xn2 @ p["w1"] + p["b1"][0]
    h = 0.5 * h * (1.0 + jax.scipy.special.erf(h / jnp.sqrt(2.0)))
    h = h @ p["w2"] + p["b2"][0]
    return x + h


if __name__ == "__main__":
    B, T, C, n_head, n_ff = 2, 8, 32, 4, 64

    key = jax.random.PRNGKey(0)
    keys = jax.random.split(key, 12)

    def w(k, shape, scale=0.05):
        return (scale * jax.random.normal(k, shape)).astype(jnp.float32)

    # Linear weights stored in (in, out) layout (PyTorch stores (out, in) and
    # applies x @ W.T; this synthetic init directly uses x @ W).
    params = {
        "ln1w": jnp.ones((1, C), jnp.float32), "ln1b": jnp.zeros((1, C), jnp.float32),
        "wq": w(keys[0], (C, C)), "bq": w(keys[1], (1, C)),
        "wk": w(keys[2], (C, C)), "bk": w(keys[3], (1, C)),
        "wv": w(keys[4], (C, C)), "bv": w(keys[5], (1, C)),
        "wo": w(keys[6], (C, C)), "bo": w(keys[7], (1, C)),
        "ln2w": jnp.ones((1, C), jnp.float32), "ln2b": jnp.zeros((1, C), jnp.float32),
        "w1": w(keys[8], (C, n_ff)), "b1": w(keys[9], (1, n_ff)),
        "w2": w(keys[10], (n_ff, C)), "b2": w(keys[11], (1, C)),
    }

    kx, _ = jax.random.split(jax.random.PRNGKey(1))
    x = jax.random.normal(kx, (B, T, C), jnp.float32)

    # causal mask (B, T, T) and a valid-input mask (B, T) with some padding zeroed
    attn_mask = jnp.broadcast_to(jnp.tril(jnp.ones((T, T), jnp.float32)), (B, T, T))
    valid_mask = jnp.ones((B, T), jnp.float32).at[1, T - 2:].set(0.0)

    out = transformer_block(x, attn_mask, valid_mask, params, n_head)
    out = jax.block_until_ready(out)

    ref = ref_block(x, attn_mask, valid_mask, params, n_head)
    assert out.shape == (B, T, C)
    # bf16 matmuls vs f32 reference -> looser tolerance than the pure-f32 version.
    err = float(jnp.max(jnp.abs(out - ref)))
    assert jnp.allclose(out, ref, atol=2e-2, rtol=2e-2), err

    print("KERNEL_OK")
</pallas_src>

<mosaic_0001>
module attributes {stable_mosaic.version = 11 : i64} {
  func.func @block_kernel(%arg0: i32, %arg1: i32, %arg2: memref<1x8x32xf32, #tpu.memory_space<vmem>>, %arg3: memref<1x8x32xf32, #tpu.memory_space<vmem>>, %arg4: memref<1x8x8xf32, #tpu.memory_space<vmem>>, %arg5: memref<1x1x8xf32, #tpu.memory_space<vmem>>, %arg6: memref<1x32xf32, #tpu.memory_space<vmem>>, %arg7: memref<1x32xf32, #tpu.memory_space<vmem>>, %arg8: memref<32x32xbf16, #tpu.memory_space<vmem>>, %arg9: memref<1x32xf32, #tpu.memory_space<vmem>>, %arg10: memref<32x64xbf16, #tpu.memory_space<vmem>>, %arg11: memref<1x64xf32, #tpu.memory_space<vmem>>, %arg12: memref<32x32xbf16, #tpu.memory_space<vmem>>, %arg13: memref<1x32xf32, #tpu.memory_space<vmem>>, %arg14: memref<1x32xf32, #tpu.memory_space<vmem>>, %arg15: memref<1x32xf32, #tpu.memory_space<vmem>>, %arg16: memref<32x64xbf16, #tpu.memory_space<vmem>>, %arg17: memref<1x64xf32, #tpu.memory_space<vmem>>, %arg18: memref<64x32xbf16, #tpu.memory_space<vmem>>, %arg19: memref<1x32xf32, #tpu.memory_space<vmem>>, %arg20: memref<1x8x32xf32, #tpu.memory_space<vmem>>) attributes {dimension_semantics = [#tpu.dimension_semantics<parallel>, #tpu.dimension_semantics<parallel>], iteration_bounds = array<i64: 2, 1>, scalar_prefetch = 0 : i64, scratch_operands = 0 : i64, tpu.core_type = #tpu.core_type<tc>, window_params = [{transform_indices = @transform_0, window_bounds = array<i64: 1, 8, 32>}, {transform_indices = @transform_1, window_bounds = array<i64: 1, 8, 32>}, {transform_indices = @transform_2, window_bounds = array<i64: 1, 8, 8>}, {transform_indices = @transform_3, window_bounds = array<i64: 1, 1, 8>}, {pipeline_mode = #tpu.pipeline_mode<synchronous>, transform_indices = @transform_4, window_bounds = array<i64: 1, 32>}, {pipeline_mode = #tpu.pipeline_mode<synchronous>, transform_indices = @transform_5, window_bounds = array<i64: 1, 32>}, {pipeline_mode = #tpu.pipeline_mode<synchronous>, transform_indices = @transform_6, window_bounds = array<i64: 32, 32>}, {pipeline_mode = #tpu.pipeline_mode<synchronous>, transform_indices = @transform_7, window_bounds = array<i64: 1, 32>}, {pipeline_mode = #tpu.pipeline_mode<synchronous>, transform_indices = @transform_8, window_bounds = array<i64: 32, 64>}, {pipeline_mode = #tpu.pipeline_mode<synchronous>, transform_indices = @transform_9, window_bounds = array<i64: 1, 64>}, {pipeline_mode = #tpu.pipeline_mode<synchronous>, transform_indices = @transform_10, window_bounds = array<i64: 32, 32>}, {pipeline_mode = #tpu.pipeline_mode<synchronous>, transform_indices = @transform_11, window_bounds = array<i64: 1, 32>}, {pipeline_mode = #tpu.pipeline_mode<synchronous>, transform_indices = @transform_12, window_bounds = array<i64: 1, 32>}, {pipeline_mode = #tpu.pipeline_mode<synchronous>, transform_indices = @transform_13, window_bounds = array<i64: 1, 32>}, {pipeline_mode = #tpu.pipeline_mode<synchronous>, transform_indices = @transform_14, window_bounds = array<i64: 32, 64>}, {pipeline_mode = #tpu.pipeline_mode<synchronous>, transform_indices = @transform_15, window_bounds = array<i64: 1, 64>}, {pipeline_mode = #tpu.pipeline_mode<synchronous>, transform_indices = @transform_16, window_bounds = array<i64: 64, 32>}, {pipeline_mode = #tpu.pipeline_mode<synchronous>, transform_indices = @transform_17, window_bounds = array<i64: 1, 32>}, {transform_indices = @transform_18, window_bounds = array<i64: 1, 8, 32>}]} {
    %c0 = arith.constant 0 : index
    %c0_0 = arith.constant 0 : index
    %c0_1 = arith.constant 0 : index
    %0 = vector.load %arg2[%c0, %c0_0, %c0_1] : memref<1x8x32xf32, #tpu.memory_space<vmem>>, vector<1x8x32xf32>
    %1 = vector.shape_cast %0 : vector<1x8x32xf32> to vector<8x32xf32>
    %c0_2 = arith.constant 0 : index
    %c0_3 = arith.constant 0 : index
    %2 = vector.load %arg6[%c0_2, %c0_3] : memref<1x32xf32, #tpu.memory_space<vmem>>, vector<1x32xf32>
    %c0_4 = arith.constant 0 : index
    %c0_5 = arith.constant 0 : index
    %3 = vector.load %arg7[%c0_4, %c0_5] : memref<1x32xf32, #tpu.memory_space<vmem>>, vector<1x32xf32>
    %cst = arith.constant dense<0.000000e+00> : vector<8xf32>
    %4 = vector.multi_reduction <add>, %1, %cst [1] : vector<8x32xf32> to vector<8xf32>
    %5 = vector.shape_cast %4 : vector<8xf32> to vector<8x1xf32>
    %cst_6 = arith.constant 3.200000e+01 : f32
    %6 = vector.broadcast %cst_6 : f32 to vector<8x1xf32>
    %7 = arith.divf %5, %6 : vector<8x1xf32>
    %8 = vector.broadcast %7 : vector<8x1xf32> to vector<8x32xf32>
    %9 = arith.subf %1, %8 : vector<8x32xf32>
    %10 = arith.mulf %9, %9 : vector<8x32xf32>
    %cst_7 = arith.constant dense<0.000000e+00> : vector<8xf32>
    %11 = vector.multi_reduction <add>, %10, %cst_7 [1] : vector<8x32xf32> to vector<8xf32>
    %12 = vector.shape_cast %11 : vector<8xf32> to vector<8x1xf32>
    %cst_8 = arith.constant 3.200000e+01 : f32
    %13 = vector.broadcast %cst_8 : f32 to vector<8x1xf32>
    %14 = arith.divf %12, %13 : vector<8x1xf32>
    %15 = vector.broadcast %7 : vector<8x1xf32> to vector<8x32xf32>
    %16 = arith.subf %1, %15 : vector<8x32xf32>
    %cst_9 = arith.constant 9.99999974E-6 : f32
    %17 = vector.broadcast %cst_9 : f32 to vector<8x1xf32>
    %18 = arith.addf %14, %17 : vector<8x1xf32>
    %19 = math.rsqrt %18 : vector<8x1xf32>
    %20 = vector.broadcast %19 : vector<8x1xf32> to vector<8x32xf32>
    %21 = arith.mulf %16, %20 : vector<8x32xf32>
    %22 = vector.broadcast %2 : vector<1x32xf32> to vector<8x32xf32>
    %23 = arith.mulf %21, %22 : vector<8x32xf32>
    %24 = vector.broadcast %3 : vector<1x32xf32> to vector<8x32xf32>
    %25 = arith.addf %23, %24 : vector<8x32xf32>
    %26 = arith.truncf %25 : vector<8x32xf32> to vector<8x32xbf16>
    %c0_10 = arith.constant 0 : index
    %c0_11 = arith.constant 0 : index
    %c0_12 = arith.constant 0 : index
    %27 = vector.load %arg3[%c0_10, %c0_11, %c0_12] : memref<1x8x32xf32, #tpu.memory_space<vmem>>, vector<1x8x32xf32>
    %28 = vector.shape_cast %27 : vector<1x8x32xf32> to vector<8x32xf32>
    %c0_13 = arith.constant 0 : index
    %c0_14 = arith.constant 0 : index
    %29 = vector.load %arg6[%c0_13, %c0_14] : memref<1x32xf32, #tpu.memory_space<vmem>>, vector<1x32xf32>
    %c0_15 = arith.constant 0 : index
    %c0_16 = arith.constant 0 : index
    %30 = vector.load %arg7[%c0_15, %c0_16] : memref<1x32xf32, #tpu.memory_space<vmem>>, vector<1x32xf32>
    %cst_17 = arith.constant dense<0.000000e+00> : vector<8xf32>
    %31 = vector.multi_reduction <add>, %28, %cst_17 [1] : vector<8x32xf32> to vector<8xf32>
    %32 = vector.shape_cast %31 : vector<8xf32> to vector<8x1xf32>
    %cst_18 = arith.constant 3.200000e+01 : f32
    %33 = vector.broadcast %cst_18 : f32 to vector<8x1xf32>
    %34 = arith.divf %32, %33 : vector<8x1xf32>
    %35 = vector.broadcast %34 : vector<8x1xf32> to vector<8x32xf32>
    %36 = arith.subf %28, %35 : vector<8x32xf32>
    %37 = arith.mulf %36, %36 : vector<8x32xf32>
    %cst_19 = arith.constant dense<0.000000e+00> : vector<8xf32>
    %38 = vector.multi_reduction <add>, %37, %cst_19 [1] : vector<8x32xf32> to vector<8xf32>
    %39 = vector.shape_cast %38 : vector<8xf32> to vector<8x1xf32>
    %cst_20 = arith.constant 3.200000e+01 : f32
    %40 = vector.broadcast %cst_20 : f32 to vector<8x1xf32>
    %41 = arith.divf %39, %40 : vector<8x1xf32>
    %42 = vector.broadcast %34 : vector<8x1xf32> to vector<8x32xf32>
    %43 = arith.subf %28, %42 : vector<8x32xf32>
    %cst_21 = arith.constant 9.99999974E-6 : f32
    %44 = vector.broadcast %cst_21 : f32 to vector<8x1xf32>
    %45 = arith.addf %41, %44 : vector<8x1xf32>
    %46 = math.rsqrt %45 : vector<8x1xf32>
    %47 = vector.broadcast %46 : vector<8x1xf32> to vector<8x32xf32>
    %48 = arith.mulf %43, %47 : vector<8x32xf32>
    %49 = vector.broadcast %29 : vector<1x32xf32> to vector<8x32xf32>
    %50 = arith.mulf %48, %49 : vector<8x32xf32>
    %51 = vector.broadcast %30 : vector<1x32xf32> to vector<8x32xf32>
    %52 = arith.addf %50, %51 : vector<8x32xf32>
    %53 = arith.truncf %52 : vector<8x32xf32> to vector<8x32xbf16>
    %c0_22 = arith.constant 0 : index
    %c0_23 = arith.constant 0 : index
    %54 = vector.load %arg8[%c0_22, %c0_23] : memref<32x32xbf16, #tpu.memory_space<vmem>>, vector<32x32xbf16>
    %cst_24 = arith.constant dense<0.000000e+00> : vector<8x32xf32>
    %55 = tpu.matmul %26, %54, %cst_24 {dimension_numbers = #tpu.dot_dimension_numbers<[1], [0], [0], [1], [0, 0, 1, 1], [], []>} : vector<8x32xbf16>, vector<32x32xbf16>, vector<8x32xf32> -> vector<8x32xf32>
    %c0_25 = arith.constant 0 : index
    %c0_26 = arith.constant 0 : index
    %56 = vector.load %arg9[%c0_25, %c0_26] : memref<1x32xf32, #tpu.memory_space<vmem>>, vector<1x32xf32>
    %57 = vector.broadcast %56 : vector<1x32xf32> to vector<8x32xf32>
    %58 = arith.addf %55, %57 : vector<8x32xf32>
    %c0_27 = arith.constant 0 : index
    %c0_28 = arith.constant 0 : index
    %59 = vector.load %arg10[%c0_27, %c0_28] : memref<32x64xbf16, #tpu.memory_space<vmem>>, vector<32x64xbf16>
    %cst_29 = arith.constant dense<0.000000e+00> : vector<8x64xf32>
    %60 = tpu.matmul %53, %59, %cst_29 {dimension_numbers = #tpu.dot_dimension_numbers<[1], [0], [0], [1], [0, 0, 1, 1], [], []>} : vector<8x32xbf16>, vector<32x64xbf16>, vector<8x64xf32> -> vector<8x64xf32>
    %c0_30 = arith.constant 0 : index
    %c0_31 = arith.constant 0 : index
    %61 = vector.load %arg11[%c0_30, %c0_31] : memref<1x64xf32, #tpu.memory_space<vmem>>, vector<1x64xf32>
    %62 = vector.broadcast %61 : vector<1x64xf32> to vector<8x64xf32>
    %63 = arith.addf %60, %62 : vector<8x64xf32>
    %64 = arith.truncf %58 : vector<8x32xf32> to vector<8x32xbf16>
    %65 = vector.extract_strided_slice %63 {offsets = [0, 0], sizes = [8, 32], strides = [1, 1]} : vector<8x64xf32> to vector<8x32xf32>
    %66 = arith.truncf %65 : vector<8x32xf32> to vector<8x32xbf16>
    %67 = vector.extract_strided_slice %63 {offsets = [0, 32], sizes = [8, 32], strides = [1, 1]} : vector<8x64xf32> to vector<8x32xf32>
    %68 = arith.truncf %67 : vector<8x32xf32> to vector<8x32xbf16>
    %c0_32 = arith.constant 0 : index
    %c0_33 = arith.constant 0 : index
    %c0_34 = arith.constant 0 : index
    %69 = vector.load %arg4[%c0_32, %c0_33, %c0_34] : memref<1x8x8xf32, #tpu.memory_space<vmem>>, vector<1x8x8xf32>
    %70 = vector.shape_cast %69 : vector<1x8x8xf32> to vector<8x8xf32>
    %cst_35 = arith.constant 0.000000e+00 : f32
    %71 = vector.broadcast %cst_35 : f32 to vector<8x8xf32>
    %72 = arith.cmpf one, %70, %71 : vector<8x8xf32>
    %c0_36 = arith.constant 0 : index
    %c0_37 = arith.constant 0 : index
    %c0_38 = arith.constant 0 : index
    %73 = vector.load %arg5[%c0_36, %c0_37, %c0_38] : memref<1x1x8xf32, #tpu.memory_space<vmem>>, vector<1x1x8xf32>
    %74 = vector.shape_cast %73 : vector<1x1x8xf32> to vector<1x8xf32>
    %cst_39 = arith.constant 0.000000e+00 : f32
    %75 = vector.broadcast %cst_39 : f32 to vector<1x8xf32>
    %76 = arith.cmpf one, %74, %75 : vector<1x8xf32>
    %77 = vector.broadcast %76 : vector<1x8xi1> to vector<8x8xi1>
    %78 = arith.andi %72, %77 : vector<8x8xi1>
    %cst_40 = arith.constant 0.000000e+00 : f32
    %79 = vector.broadcast %cst_40 : f32 to vector<8x32xf32>
    %80 = vector.extract_strided_slice %64 {offsets = [0, 0], sizes = [8, 8], strides = [1, 1]} : vector<8x32xbf16> to vector<8x8xbf16>
    %81 = vector.extract_strided_slice %66 {offsets = [0, 0], sizes = [8, 8], strides = [1, 1]} : vector<8x32xbf16> to vector<8x8xbf16>
    %cst_41 = arith.constant dense<0.000000e+00> : vector<8x8xf32>
    %82 = tpu.matmul %80, %81, %cst_41 {dimension_numbers = #tpu.dot_dimension_numbers<[1], [1], [0], [0], [0, 0, 1, 0], [], []>} : vector<8x8xbf16>, vector<8x8xbf16>, vector<8x8xf32> -> vector<8x8xf32>
    %cst_42 = arith.constant 0.353553385 : f32
    %83 = vector.broadcast %cst_42 : f32 to vector<8x8xf32>
    %84 = arith.mulf %82, %83 : vector<8x8xf32>
    %cst_43 = arith.constant -1.000000e+06 : f32
    %85 = vector.broadcast %cst_43 : f32 to vector<8x8xf32>
    %86 = arith.select %78, %84, %85 : vector<8x8xi1>, vector<8x8xf32>
    %cst_44 = arith.constant dense<0xFF800000> : vector<8xf32>
    %87 = vector.multi_reduction <maximumf>, %86, %cst_44 [1] : vector<8x8xf32> to vector<8xf32>
    %88 = vector.shape_cast %87 : vector<8xf32> to vector<8x1xf32>
    %89 = vector.broadcast %88 : vector<8x1xf32> to vector<8x8xf32>
    %90 = arith.subf %86, %89 : vector<8x8xf32>
    %91 = math.exp %90 : vector<8x8xf32>
    %cst_45 = arith.constant dense<0.000000e+00> : vector<8xf32>
    %92 = vector.multi_reduction <add>, %91, %cst_45 [1] : vector<8x8xf32> to vector<8xf32>
    %93 = vector.shape_cast %92 : vector<8xf32> to vector<8x1xf32>
    %94 = tpu.reciprocal %93 {approx = true} : vector<8x1xf32> -> vector<8x1xf32>
    %95 = vector.broadcast %94 : vector<8x1xf32> to vector<8x8xf32>
    %96 = arith.mulf %91, %95 : vector<8x8xf32>
    %97 = arith.truncf %96 : vector<8x8xf32> to vector<8x8xbf16>
    %98 = vector.extract_strided_slice %68 {offsets = [0, 0], sizes = [8, 8], strides = [1, 1]} : vector<8x32xbf16> to vector<8x8xbf16>
    %cst_46 = arith.constant dense<0.000000e+00> : vector<8x8xf32>
    %99 = tpu.matmul %97, %98, %cst_46 {dimension_numbers = #tpu.dot_dimension_numbers<[1], [0], [0], [1], [0, 0, 1, 1], [], []>} : vector<8x8xbf16>, vector<8x8xbf16>, vector<8x8xf32> -> vector<8x8xf32>
    %100 = arith.truncf %99 : vector<8x8xf32> to vector<8x8xbf16>
    %c0_47 = arith.constant 0 : index
    %c0_48 = arith.constant 0 : index
    %101 = vector.load %arg12[%c0_47, %c0_48] : memref<32x32xbf16, #tpu.memory_space<vmem>>, vector<8x32xbf16>
    %cst_49 = arith.constant dense<0.000000e+00> : vector<8x32xf32>
    %102 = tpu.matmul %100, %101, %cst_49 {dimension_numbers = #tpu.dot_dimension_numbers<[1], [0], [0], [1], [0, 0, 1, 1], [], []>} : vector<8x8xbf16>, vector<8x32xbf16>, vector<8x32xf32> -> vector<8x32xf32>
    %103 = arith.addf %79, %102 : vector<8x32xf32>
    %104 = vector.extract_strided_slice %64 {offsets = [0, 8], sizes = [8, 8], strides = [1, 1]} : vector<8x32xbf16> to vector<8x8xbf16>
    %105 = vector.extract_strided_slice %66 {offsets = [0, 8], sizes = [8, 8], strides = [1, 1]} : vector<8x32xbf16> to vector<8x8xbf16>
    %cst_50 = arith.constant dense<0.000000e+00> : vector<8x8xf32>
    %106 = tpu.matmul %104, %105, %cst_50 {dimension_numbers = #tpu.dot_dimension_numbers<[1], [1], [0], [0], [0, 0, 1, 0], [], []>} : vector<8x8xbf16>, vector<8x8xbf16>, vector<8x8xf32> -> vector<8x8xf32>
    %cst_51 = arith.constant 0.353553385 : f32
    %107 = vector.broadcast %cst_51 : f32 to vector<8x8xf32>
    %108 = arith.mulf %106, %107 : vector<8x8xf32>
    %cst_52 = arith.constant -1.000000e+06 : f32
    %109 = vector.broadcast %cst_52 : f32 to vector<8x8xf32>
    %110 = arith.select %78, %108, %109 : vector<8x8xi1>, vector<8x8xf32>
    %cst_53 = arith.constant dense<0xFF800000> : vector<8xf32>
    %111 = vector.multi_reduction <maximumf>, %110, %cst_53 [1] : vector<8x8xf32> to vector<8xf32>
    %112 = vector.shape_cast %111 : vector<8xf32> to vector<8x1xf32>
    %113 = vector.broadcast %112 : vector<8x1xf32> to vector<8x8xf32>
    %114 = arith.subf %110, %113 : vector<8x8xf32>
    %115 = math.exp %114 : vector<8x8xf32>
    %cst_54 = arith.constant dense<0.000000e+00> : vector<8xf32>
    %116 = vector.multi_reduction <add>, %115, %cst_54 [1] : vector<8x8xf32> to vector<8xf32>
    %117 = vector.shape_cast %116 : vector<8xf32> to vector<8x1xf32>
    %118 = tpu.reciprocal %117 {approx = true} : vector<8x1xf32> -> vector<8x1xf32>
    %119 = vector.broadcast %118 : vector<8x1xf32> to vector<8x8xf32>
    %120 = arith.mulf %115, %119 : vector<8x8xf32>
    %121 = arith.truncf %120 : vector<8x8xf32> to vector<8x8xbf16>
    %122 = vector.extract_strided_slice %68 {offsets = [0, 8], sizes = [8, 8], strides = [1, 1]} : vector<8x32xbf16> to vector<8x8xbf16>
    %cst_55 = arith.constant dense<0.000000e+00> : vector<8x8xf32>
    %123 = tpu.matmul %121, %122, %cst_55 {dimension_numbers = #tpu.dot_dimension_numbers<[1], [0], [0], [1], [0, 0, 1, 1], [], []>} : vector<8x8xbf16>, vector<8x8xbf16>, vector<8x8xf32> -> vector<8x8xf32>
    %124 = arith.truncf %123 : vector<8x8xf32> to vector<8x8xbf16>
    %c8 = arith.constant 8 : index
    %c0_56 = arith.constant 0 : index
    %125 = vector.load %arg12[%c8, %c0_56] : memref<32x32xbf16, #tpu.memory_space<vmem>>, vector<8x32xbf16>
    %cst_57 = arith.constant dense<0.000000e+00> : vector<8x32xf32>
    %126 = tpu.matmul %124, %125, %cst_57 {dimension_numbers = #tpu.dot_dimension_numbers<[1], [0], [0], [1], [0, 0, 1, 1], [], []>} : vector<8x8xbf16>, vector<8x32xbf16>, vector<8x32xf32> -> vector<8x32xf32>
    %127 = arith.addf %103, %126 : vector<8x32xf32>
    %128 = vector.extract_strided_slice %64 {offsets = [0, 16], sizes = [8, 8], strides = [1, 1]} : vector<8x32xbf16> to vector<8x8xbf16>
    %129 = vector.extract_strided_slice %66 {offsets = [0, 16], sizes = [8, 8], strides = [1, 1]} : vector<8x32xbf16> to vector<8x8xbf16>
    %cst_58 = arith.constant dense<0.000000e+00> : vector<8x8xf32>
    %130 = tpu.matmul %128, %129, %cst_58 {dimension_numbers = #tpu.dot_dimension_numbers<[1], [1], [0], [0], [0, 0, 1, 0], [], []>} : vector<8x8xbf16>, vector<8x8xbf16>, vector<8x8xf32> -> vector<8x8xf32>
    %cst_59 = arith.constant 0.353553385 : f32
    %131 = vector.broadcast %cst_59 : f32 to vector<8x8xf32>
    %132 = arith.mulf %130, %131 : vector<8x8xf32>
    %cst_60 = arith.constant -1.000000e+06 : f32
    %133 = vector.broadcast %cst_60 : f32 to vector<8x8xf32>
    %134 = arith.select %78, %132, %133 : vector<8x8xi1>, vector<8x8xf32>
    %cst_61 = arith.constant dense<0xFF800000> : vector<8xf32>
    %135 = vector.multi_reduction <maximumf>, %134, %cst_61 [1] : vector<8x8xf32> to vector<8xf32>
    %136 = vector.shape_cast %135 : vector<8xf32> to vector<8x1xf32>
    %137 = vector.broadcast %136 : vector<8x1xf32> to vector<8x8xf32>
    %138 = arith.subf %134, %137 : vector<8x8xf32>
    %139 = math.exp %138 : vector<8x8xf32>
    %cst_62 = arith.constant dense<0.000000e+00> : vector<8xf32>
    %140 = vector.multi_reduction <add>, %139, %cst_62 [1] : vector<8x8xf32> to vector<8xf32>
    %141 = vector.shape_cast %140 : vector<8xf32> to vector<8x1xf32>
    %142 = tpu.reciprocal %141 {approx = true} : vector<8x1xf32> -> vector<8x1xf32>
    %143 = vector.broadcast %142 : vector<8x1xf32> to vector<8x8xf32>
    %144 = arith.mulf %139, %143 : vector<8x8xf32>
    %145 = arith.truncf %144 : vector<8x8xf32> to vector<8x8xbf16>
    %146 = vector.extract_strided_slice %68 {offsets = [0, 16], sizes = [8, 8], strides = [1, 1]} : vector<8x32xbf16> to vector<8x8xbf16>
    %cst_63 = arith.constant dense<0.000000e+00> : vector<8x8xf32>
    %147 = tpu.matmul %145, %146, %cst_63 {dimension_numbers = #tpu.dot_dimension_numbers<[1], [0], [0], [1], [0, 0, 1, 1], [], []>} : vector<8x8xbf16>, vector<8x8xbf16>, vector<8x8xf32> -> vector<8x8xf32>
    %148 = arith.truncf %147 : vector<8x8xf32> to vector<8x8xbf16>
    %c16 = arith.constant 16 : index
    %c0_64 = arith.constant 0 : index
    %149 = vector.load %arg12[%c16, %c0_64] : memref<32x32xbf16, #tpu.memory_space<vmem>>, vector<8x32xbf16>
    %cst_65 = arith.constant dense<0.000000e+00> : vector<8x32xf32>
    %150 = tpu.matmul %148, %149, %cst_65 {dimension_numbers = #tpu.dot_dimension_numbers<[1], [0], [0], [1], [0, 0, 1, 1], [], []>} : vector<8x8xbf16>, vector<8x32xbf16>, vector<8x32xf32> -> vector<8x32xf32>
    %151 = arith.addf %127, %150 : vector<8x32xf32>
    %152 = vector.extract_strided_slice %64 {offsets = [0, 24], sizes = [8, 8], strides = [1, 1]} : vector<8x32xbf16> to vector<8x8xbf16>
    %153 = vector.extract_strided_slice %66 {offsets = [0, 24], sizes = [8, 8], strides = [1, 1]} : vector<8x32xbf16> to vector<8x8xbf16>
    %cst_66 = arith.constant dense<0.000000e+00> : vector<8x8xf32>
    %154 = tpu.matmul %152, %153, %cst_66 {dimension_numbers = #tpu.dot_dimension_numbers<[1], [1], [0], [0], [0, 0, 1, 0], [], []>} : vector<8x8xbf16>, vector<8x8xbf16>, vector<8x8xf32> -> vector<8x8xf32>
    %cst_67 = arith.constant 0.353553385 : f32
    %155 = vector.broadcast %cst_67 : f32 to vector<8x8xf32>
    %156 = arith.mulf %154, %155 : vector<8x8xf32>
    %cst_68 = arith.constant -1.000000e+06 : f32
    %157 = vector.broadcast %cst_68 : f32 to vector<8x8xf32>
    %158 = arith.select %78, %156, %157 : vector<8x8xi1>, vector<8x8xf32>
    %cst_69 = arith.constant dense<0xFF800000> : vector<8xf32>
    %159 = vector.multi_reduction <maximumf>, %158, %cst_69 [1] : vector<8x8xf32> to vector<8xf32>
    %160 = vector.shape_cast %159 : vector<8xf32> to vector<8x1xf32>
    %161 = vector.broadcast %160 : vector<8x1xf32> to vector<8x8xf32>
    %162 = arith.subf %158, %161 : vector<8x8xf32>
    %163 = math.exp %162 : vector<8x8xf32>
    %cst_70 = arith.constant dense<0.000000e+00> : vector<8xf32>
    %164 = vector.multi_reduction <add>, %163, %cst_70 [1] : vector<8x8xf32> to vector<8xf32>
    %165 = vector.shape_cast %164 : vector<8xf32> to vector<8x1xf32>
    %166 = tpu.reciprocal %165 {approx = true} : vector<8x1xf32> -> vector<8x1xf32>
    %167 = vector.broadcast %166 : vector<8x1xf32> to vector<8x8xf32>
    %168 = arith.mulf %163, %167 : vector<8x8xf32>
    %169 = arith.truncf %168 : vector<8x8xf32> to vector<8x8xbf16>
    %170 = vector.extract_strided_slice %68 {offsets = [0, 24], sizes = [8, 8], strides = [1, 1]} : vector<8x32xbf16> to vector<8x8xbf16>
    %cst_71 = arith.constant dense<0.000000e+00> : vector<8x8xf32>
    %171 = tpu.matmul %169, %170, %cst_71 {dimension_numbers = #tpu.dot_dimension_numbers<[1], [0], [0], [1], [0, 0, 1, 1], [], []>} : vector<8x8xbf16>, vector<8x8xbf16>, vector<8x8xf32> -> vector<8x8xf32>
    %172 = arith.truncf %171 : vector<8x8xf32> to vector<8x8xbf16>
    %c24 = arith.constant 24 : index
    %c0_72 = arith.constant 0 : index
    %173 = vector.load %arg12[%c24, %c0_72] : memref<32x32xbf16, #tpu.memory_space<vmem>>, vector<8x32xbf16>
    %cst_73 = arith.constant dense<0.000000e+00> : vector<8x32xf32>
    %174 = tpu.matmul %172, %173, %cst_73 {dimension_numbers = #tpu.dot_dimension_numbers<[1], [0], [0], [1], [0, 0, 1, 1], [], []>} : vector<8x8xbf16>, vector<8x32xbf16>, vector<8x32xf32> -> vector<8x32xf32>
    %175 = arith.addf %151, %174 : vector<8x32xf32>
    %176 = arith.addf %1, %175 : vector<8x32xf32>
    %c0_74 = arith.constant 0 : index
    %c0_75 = arith.constant 0 : index
    %177 = vector.load %arg13[%c0_74, %c0_75] : memref<1x32xf32, #tpu.memory_space<vmem>>, vector<1x32xf32>
    %178 = vector.broadcast %177 : vector<1x32xf32> to vector<8x32xf32>
    %179 = arith.addf %176, %178 : vector<8x32xf32>
    %c0_76 = arith.constant 0 : index
    %c0_77 = arith.constant 0 : index
    %180 = vector.load %arg14[%c0_76, %c0_77] : memref<1x32xf32, #tpu.memory_space<vmem>>, vector<1x32xf32>
    %c0_78 = arith.constant 0 : index
    %c0_79 = arith.constant 0 : index
    %181 = vector.load %arg15[%c0_78, %c0_79] : memref<1x32xf32, #tpu.memory_space<vmem>>, vector<1x32xf32>
    %cst_80 = arith.constant dense<0.000000e+00> : vector<8xf32>
    %182 = vector.multi_reduction <add>, %179, %cst_80 [1] : vector<8x32xf32> to vector<8xf32>
    %183 = vector.shape_cast %182 : vector<8xf32> to vector<8x1xf32>
    %cst_81 = arith.constant 3.200000e+01 : f32
    %184 = vector.broadcast %cst_81 : f32 to vector<8x1xf32>
    %185 = arith.divf %183, %184 : vector<8x1xf32>
    %186 = vector.broadcast %185 : vector<8x1xf32> to vector<8x32xf32>
    %187 = arith.subf %179, %186 : vector<8x32xf32>
    %188 = arith.mulf %187, %187 : vector<8x32xf32>
    %cst_82 = arith.constant dense<0.000000e+00> : vector<8xf32>
    %189 = vector.multi_reduction <add>, %188, %cst_82 [1] : vector<8x32xf32> to vector<8xf32>
    %190 = vector.shape_cast %189 : vector<8xf32> to vector<8x1xf32>
    %cst_83 = arith.constant 3.200000e+01 : f32
    %191 = vector.broadcast %cst_83 : f32 to vector<8x1xf32>
    %192 = arith.divf %190, %191 : vector<8x1xf32>
    %193 = vector.broadcast %185 : vector<8x1xf32> to vector<8x32xf32>
    %194 = arith.subf %179, %193 : vector<8x32xf32>
    %cst_84 = arith.constant 9.99999974E-6 : f32
    %195 = vector.broadcast %cst_84 : f32 to vector<8x1xf32>
    %196 = arith.addf %192, %195 : vector<8x1xf32>
    %197 = math.rsqrt %196 : vector<8x1xf32>
    %198 = vector.broadcast %197 : vector<8x1xf32> to vector<8x32xf32>
    %199 = arith.mulf %194, %198 : vector<8x32xf32>
    %200 = vector.broadcast %180 : vector<1x32xf32> to vector<8x32xf32>
    %201 = arith.mulf %199, %200 : vector<8x32xf32>
    %202 = vector.broadcast %181 : vector<1x32xf32> to vector<8x32xf32>
    %203 = arith.addf %201, %202 : vector<8x32xf32>
    %204 = arith.truncf %203 : vector<8x32xf32> to vector<8x32xbf16>
    %cst_85 = arith.constant 0.000000e+00 : f32
    %205 = vector.broadcast %cst_85 : f32 to vector<8x32xf32>
    %c0_86 = arith.constant 0 : index
    %c0_87 = arith.constant 0 : index
    %206 = vector.load %arg16[%c0_86, %c0_87] : memref<32x64xbf16, #tpu.memory_space<vmem>>, vector<32x64xbf16>
    %cst_88 = arith.constant dense<0.000000e+00> : vector<8x64xf32>
    %207 = tpu.matmul %204, %206, %cst_88 {dimension_numbers = #tpu.dot_dimension_numbers<[1], [0], [0], [1], [0, 0, 1, 1], [], []>} : vector<8x32xbf16>, vector<32x64xbf16>, vector<8x64xf32> -> vector<8x64xf32>
    %c0_89 = arith.constant 0 : index
    %c0_90 = arith.constant 0 : index
    %208 = vector.load %arg17[%c0_89, %c0_90] : memref<1x64xf32, #tpu.memory_space<vmem>>, vector<1x64xf32>
    %209 = vector.broadcast %208 : vector<1x64xf32> to vector<8x64xf32>
    %210 = arith.addf %207, %209 : vector<8x64xf32>
    %cst_91 = arith.constant 5.000000e-01 : f32
    %211 = vector.broadcast %cst_91 : f32 to vector<8x64xf32>
    %212 = arith.mulf %211, %210 : vector<8x64xf32>
    %cst_92 = arith.constant 0.707106769 : f32
    %213 = vector.broadcast %cst_92 : f32 to vector<8x64xf32>
    %214 = arith.mulf %210, %213 : vector<8x64xf32>
    %215 = math.erf %214 : vector<8x64xf32>
    %cst_93 = arith.constant 1.000000e+00 : f32
    %216 = vector.broadcast %cst_93 : f32 to vector<8x64xf32>
    %217 = arith.addf %216, %215 : vector<8x64xf32>
    %218 = arith.mulf %212, %217 : vector<8x64xf32>
    %219 = arith.truncf %218 : vector<8x64xf32> to vector<8x64xbf16>
    %c0_94 = arith.constant 0 : index
    %c0_95 = arith.constant 0 : index
    %220 = vector.load %arg18[%c0_94, %c0_95] : memref<64x32xbf16, #tpu.memory_space<vmem>>, vector<64x32xbf16>
    %cst_96 = arith.constant dense<0.000000e+00> : vector<8x32xf32>
    %221 = tpu.matmul %219, %220, %cst_96 {dimension_numbers = #tpu.dot_dimension_numbers<[1], [0], [0], [1], [0, 0, 1, 1], [], []>} : vector<8x64xbf16>, vector<64x32xbf16>, vector<8x32xf32> -> vector<8x32xf32>
    %222 = arith.addf %205, %221 : vector<8x32xf32>
    %223 = arith.addf %179, %222 : vector<8x32xf32>
    %c0_97 = arith.constant 0 : index
    %c0_98 = arith.constant 0 : index
    %224 = vector.load %arg19[%c0_97, %c0_98] : memref<1x32xf32, #tpu.memory_space<vmem>>, vector<1x32xf32>
    %225 = vector.broadcast %224 : vector<1x32xf32> to vector<8x32xf32>
    %226 = arith.addf %223, %225 : vector<8x32xf32>
    %c0_99 = arith.constant 0 : index
    %c0_100 = arith.constant 0 : index
    %c0_101 = arith.constant 0 : index
    %227 = vector.load %arg20[%c0_99, %c0_100, %c0_101] : memref<1x8x32xf32, #tpu.memory_space<vmem>>, vector<1x8x32xf32>
    %228 = vector.shape_cast %227 : vector<1x8x32xf32> to vector<8x32xf32>
    %229 = vector.shape_cast %226 : vector<8x32xf32> to vector<1x8x32xf32>
    tpu.vector_store %arg20[%c0_99, %c0_100, %c0_101], %229 {strides = array<i32>} : memref<1x8x32xf32, #tpu.memory_space<vmem>>, vector<1x8x32xf32>,
    return
  }
  func.func @transform_0(%arg0: i32, %arg1: i32) -> (i32, i32, i32) {
    %c0_i32 = arith.constant 0 : i32
    %c0_i32_0 = arith.constant 0 : i32
    return %arg0, %arg1, %c0_i32 : i32, i32, i32
  }
  func.func @transform_1(%arg0: i32, %arg1: i32) -> (i32, i32, i32) {
    %c0_i32 = arith.constant 0 : i32
    %c0_i32_0 = arith.constant 0 : i32
    %c0_i32_1 = arith.constant 0 : i32
    return %arg0, %c0_i32, %c0_i32_0 : i32, i32, i32
  }
  func.func @transform_2(%arg0: i32, %arg1: i32) -> (i32, i32, i32) {
    %c0_i32 = arith.constant 0 : i32
    %c0_i32_0 = arith.constant 0 : i32
    return %arg0, %arg1, %c0_i32 : i32, i32, i32
  }
  func.func @transform_3(%arg0: i32, %arg1: i32) -> (i32, i32, i32) {
    %c0_i32 = arith.constant 0 : i32
    %c0_i32_0 = arith.constant 0 : i32
    %c0_i32_1 = arith.constant 0 : i32
    return %arg0, %c0_i32, %c0_i32_0 : i32, i32, i32
  }
  func.func @transform_4(%arg0: i32, %arg1: i32) -> (i32, i32) {
    %c0_i32 = arith.constant 0 : i32
    %c0_i32_0 = arith.constant 0 : i32
    %c0_i32_1 = arith.constant 0 : i32
    return %c0_i32, %c0_i32_0 : i32, i32
  }
  func.func @transform_5(%arg0: i32, %arg1: i32) -> (i32, i32) {
    %c0_i32 = arith.constant 0 : i32
    %c0_i32_0 = arith.constant 0 : i32
    %c0_i32_1 = arith.constant 0 : i32
    return %c0_i32, %c0_i32_0 : i32, i32
  }
  func.func @transform_6(%arg0: i32, %arg1: i32) -> (i32, i32) {
    %c0_i32 = arith.constant 0 : i32
    %c0_i32_0 = arith.constant 0 : i32
    %c0_i32_1 = arith.constant 0 : i32
    return %c0_i32, %c0_i32_0 : i32, i32
  }
  func.func @transform_7(%arg0: i32, %arg1: i32) -> (i32, i32) {
    %c0_i32 = arith.constant 0 : i32
    %c0_i32_0 = arith.constant 0 : i32
    %c0_i32_1 = arith.constant 0 : i32
    return %c0_i32, %c0_i32_0 : i32, i32
  }
  func.func @transform_8(%arg0: i32, %arg1: i32) -> (i32, i32) {
    %c0_i32 = arith.constant 0 : i32
    %c0_i32_0 = arith.constant 0 : i32
    %c0_i32_1 = arith.constant 0 : i32
    return %c0_i32, %c0_i32_0 : i32, i32
  }
  func.func @transform_9(%arg0: i32, %arg1: i32) -> (i32, i32) {
    %c0_i32 = arith.constant 0 : i32
    %c0_i32_0 = arith.constant 0 : i32
    %c0_i32_1 = arith.constant 0 : i32
    return %c0_i32, %c0_i32_0 : i32, i32
  }
  func.func @transform_10(%arg0: i32, %arg1: i32) -> (i32, i32) {
    %c0_i32 = arith.constant 0 : i32
    %c0_i32_0 = arith.constant 0 : i32
    %c0_i32_1 = arith.constant 0 : i32
    return %c0_i32, %c0_i32_0 : i32, i32
  }
  func.func @transform_11(%arg0: i32, %arg1: i32) -> (i32, i32) {
    %c0_i32 = arith.constant 0 : i32
    %c0_i32_0 = arith.constant 0 : i32
    %c0_i32_1 = arith.constant 0 : i32
    return %c0_i32, %c0_i32_0 : i32, i32
  }
  func.func @transform_12(%arg0: i32, %arg1: i32) -> (i32, i32) {
    %c0_i32 = arith.constant 0 : i32
    %c0_i32_0 = arith.constant 0 : i32
    %c0_i32_1 = arith.constant 0 : i32
    return %c0_i32, %c0_i32_0 : i32, i32
  }
  func.func @transform_13(%arg0: i32, %arg1: i32) -> (i32, i32) {
    %c0_i32 = arith.constant 0 : i32
    %c0_i32_0 = arith.constant 0 : i32
    %c0_i32_1 = arith.constant 0 : i32
    return %c0_i32, %c0_i32_0 : i32, i32
  }
  func.func @transform_14(%arg0: i32, %arg1: i32) -> (i32, i32) {
    %c0_i32 = arith.constant 0 : i32
    %c0_i32_0 = arith.constant 0 : i32
    %c0_i32_1 = arith.constant 0 : i32
    return %c0_i32, %c0_i32_0 : i32, i32
  }
  func.func @transform_15(%arg0: i32, %arg1: i32) -> (i32, i32) {
    %c0_i32 = arith.constant 0 : i32
    %c0_i32_0 = arith.constant 0 : i32
    %c0_i32_1 = arith.constant 0 : i32
    return %c0_i32, %c0_i32_0 : i32, i32
  }
  func.func @transform_16(%arg0: i32, %arg1: i32) -> (i32, i32) {
    %c0_i32 = arith.constant 0 : i32
    %c0_i32_0 = arith.constant 0 : i32
    %c0_i32_1 = arith.constant 0 : i32
    return %c0_i32, %c0_i32_0 : i32, i32
  }
  func.func @transform_17(%arg0: i32, %arg1: i32) -> (i32, i32) {
    %c0_i32 = arith.constant 0 : i32
    %c0_i32_0 = arith.constant 0 : i32
    %c0_i32_1 = arith.constant 0 : i32
    return %c0_i32, %c0_i32_0 : i32, i32
  }
  func.func @transform_18(%arg0: i32, %arg1: i32) -> (i32, i32, i32) {
    %c0_i32 = arith.constant 0 : i32
    %c0_i32_0 = arith.constant 0 : i32
    return %arg0, %arg1, %c0_i32 : i32, i32, i32
  }
}

</mosaic_0001>

<llo_original>
// kernel: tpu_custom_call.1
$region0: #{tpu_custom_call.1}
  #allocation0 [shape = 'u32[]', space=smem, size = 0x4, offset = 0x4, fixed_abs, tag = 'smem constant byte address 0x4 - core index']
  #allocation1 [shape = 'u32[72,128]{1,0:T(1,128)}', space=vmem, size = 0x9000, scoped, tag = 'internal scratch']
  %s0 = inlined_call_operand.vmem [shape: f32[2,8,32], index: 0, kind: input, shape index: {}]
  %s1 = inlined_call_operand.vmem [shape: f32[2,8,32], index: 1, kind: input, shape index: {}]
  %s2 = inlined_call_operand.vmem [shape: f32[2,8,8], index: 2, kind: input, shape index: {}]
  %s3 = inlined_call_operand.vmem [shape: f32[2,1,8], index: 3, kind: input, shape index: {}]
  %s4 = inlined_call_operand.vmem [shape: f32[1,32], index: 4, kind: input, shape index: {}]
  %s5 = inlined_call_operand.vmem [shape: f32[1,32], index: 5, kind: input, shape index: {}]
  %s6 = inlined_call_operand.hbm [shape: bf16[32,32], index: 6, kind: input, shape index: {}]
  %s7 = inlined_call_operand.vmem [shape: f32[1,32], index: 7, kind: input, shape index: {}]
  %s8 = inlined_call_operand.hbm [shape: bf16[32,64], index: 8, kind: input, shape index: {}]
  %s9 = inlined_call_operand.vmem [shape: f32[1,64], index: 9, kind: input, shape index: {}]
  %s10 = inlined_call_operand.hbm [shape: bf16[32,32], index: 10, kind: input, shape index: {}]
  %s11 = inlined_call_operand.vmem [shape: f32[1,32], index: 11, kind: input, shape index: {}]
  %s12 = inlined_call_operand.vmem [shape: f32[1,32], index: 12, kind: input, shape index: {}]
  %s13 = inlined_call_operand.vmem [shape: f32[1,32], index: 13, kind: input, shape index: {}]
  %s14 = inlined_call_operand.hbm [shape: bf16[32,64], index: 14, kind: input, shape index: {}]
  %s15 = inlined_call_operand.vmem [shape: f32[1,64], index: 15, kind: input, shape index: {}]
  %s16 = inlined_call_operand.vmem [shape: bf16[64,32], index: 16, kind: input, shape index: {}]
  %s17 = inlined_call_operand.vmem [shape: f32[1,32], index: 17, kind: input, shape index: {}]
  %s18 = inlined_call_operand.hbm [shape: f32[2,8,32], index: 18, kind: output, shape index: {}]
  %s19 = sld [smem:[#allocation0]]
  $region121: #{tpu_custom_call.1} parent=0
    _
  %s21 = ssub.s32 1, %s19
  %s22 = scalar_select 0, %s21, %s19
  $region1: #{tpu_custom_call.1} parent=0
    #allocation2 [shape = 'u8[8192]{0}', space=vmem, size = 0x2000, scoped, tag = 'input window, operand 6, single buffered']
    #allocation3 [shape = 's32[2]{0}', space=sflag, size = 0x8, scoped, tag = 'scoped memory for tpu_custom_call.1']
    #allocation4 [shape = 's32[2]{0}', space=sflag, size = 0x8, scoped, tag = 'scoped memory for tpu_custom_call.1']
    #allocation5 [shape = 'u8[8192]{0}', space=vmem, size = 0x2000, scoped, tag = 'input window, operand 8, single buffered']
    #allocation6 [shape = 's32[1]{0}', space=sflag, size = 0x4, scoped, tag = 'scoped memory for tpu_custom_call.1']
    #allocation7 [shape = 'u8[8192]{0}', space=vmem, size = 0x2000, scoped, tag = 'input window, operand 10, single buffered']
    #allocation8 [shape = 'u8[8192]{0}', space=vmem, size = 0x2000, scoped, tag = 'input window, operand 14, single buffered']
    #allocation9 [shape = 's32[1]{0}', space=sflag, size = 0x4, scoped, tag = 'scoped memory for tpu_custom_call.1']
    #allocation10 [shape = 'u8[8192]{0}', space=vmem, size = 0x2000, scoped, tag = 'output window, operand 0']
    %23 = vsyncpa [#allocation3], 0
    %24 = vsyncpa [#allocation6], 0
    %25 = vsyncpa [#allocation9], 0
    %26 = vsyncpa [#allocation4], 0
    %s27 = scalar_lea.sflag [#allocation4], 1
    %28 = vsyncpa %s27, 0
    loop: start=0, step=1, limit=4
    $region2: #{tpu_custom_call.1} parent=1 // loop_pre_header
      _
    $region3: #{tpu_custom_call.1} parent=1 // loop_header
      %s30 = sphi 0, %s34
      %p31 = scmp.ge.s32.totalorder %s30, 4
      %s37 = sphi 0, %s49
      %s38 = sphi 0, %s45
      %s39 = sphi 0, %s37
      %s40 = sphi 0, %s38
      %s41 = sphi 0, %s39
      %s42 = sphi 0, %s40
      %s54 = sphi 0, %s56
      %s57 = sphi 0, %s54
      %s58 = sphi 0, %s57
      %s74 = sphi 0, %s58
      %s80 = sphi 0, %s82
      %s83 = sphi 0, %s80
      %s84 = sphi 0, %s83
      %s100 = sphi 0, %s84
      %s108 = sphi 0, %s110
      %s111 = sphi 0, %s108
      %s112 = sphi 0, %s111
      %s128 = sphi 0, %s112
      %s134 = sphi 0, %s136
      %s137 = sphi 0, %s134
      %s138 = sphi 0, %s137
      %s154 = sphi 0, %s138
      %s158 = sphi 0, %s158
      %s160 = sphi 0, %s158
      %s161 = sphi 0, %s160
      %s175 = sphi 0, %s161
      %s179 = sphi 0, %s179
      %s181 = sphi 0, %s179
      %s182 = sphi 0, %s181
      %s196 = sphi 0, %s182
      %s200 = sphi 0, %s200
      %s202 = sphi 0, %s200
      %s203 = sphi 0, %s202
      %s217 = sphi 0, %s203
      %s221 = sphi 0, %s221
      %s223 = sphi 0, %s221
      %s224 = sphi 0, %s223
      %s238 = sphi 0, %s224
      %s242 = sphi 0, %s242
      %s244 = sphi 0, %s242
      %s245 = sphi 0, %s244
      %s259 = sphi 0, %s245
      %s263 = sphi 0, %s263
      %s265 = sphi 0, %s263
      %s266 = sphi 0, %s265
      %s280 = sphi 0, %s266
      %s284 = sphi 0, %s284
      %s286 = sphi 0, %s284
      %s287 = sphi 0, %s286
      %s301 = sphi 0, %s287
      %s305 = sphi 0, %s305
      %s307 = sphi 0, %s305
      %s308 = sphi 0, %s307
      %s322 = sphi 0, %s308
      %s326 = sphi 0, %s326
      %s328 = sphi 0, %s326
      %s329 = sphi 0, %s328
      %s343 = sphi 0, %s329
      %s347 = sphi 0, %s347
      %s349 = sphi 0, %s347
      %s350 = sphi 0, %s349
      %s364 = sphi 0, %s350
      %s368 = sphi 0, %s368
      %s370 = sphi 0, %s368
      %s371 = sphi 0, %s370
      %s385 = sphi 0, %s371
      %s389 = sphi 0, %s389
      %s391 = sphi 0, %s389
      %s392 = sphi 0, %s391
      %s406 = sphi 0, %s392
      %s410 = sphi 0, %s410
      %s412 = sphi 0, %s410
      %s413 = sphi 0, %s412
      %s427 = sphi 0, %s413
      %s431 = sphi 0, %s431
      %s433 = sphi 0, %s431
      %s434 = sphi 0, %s433
      %s448 = sphi 0, %s434
      %s456 = sphi 0, %s458
      %s459 = sphi 0, %s456
      %s460 = sphi 0, %s459
      %s476 = sphi 0, %s460
    $region4: #{tpu_custom_call.1} parent=1 // loop_header_branch
      %33 = sbr.rel (%p31) target = $region8
    $region5: #{tpu_custom_call.1} parent=1 // loop_body
      %s35 = ssub.s32 %s30, 1
      %s36 = ssub.s32 %s30, 2
      %s43 = sadd.s32 1, %s38
      %p44 = scmp.ge.s32.totalorder %s43, 1
      %s45 = scalar_select %p44, 0, %s43
      %s46 = sadd.s32 1, %s37
      %s47 = scalar_select %p44, %s46, %s37
      %p48 = scmp.ge.s32.totalorder %s47, 2
      %s49 = scalar_select %p48, 0, %s47
      %s50 = ssub.s32 %s37, %s49
      %s51 = ssub.s32 %s38, %s45
      %s52 = sor.u32 %s50, %s51
      %p53 = scmp.eq.s32.totalorder %s52, 0
      %s55 = sadd.s32 %s54, 1
      %s56 = scalar_select %p53, %s54, %s55
      %p59 = pneg %p53
      %p60 = scmp.eq.s32.totalorder %s30, 1
      %p61 = por %p59, %p60
      %p62 = scmp.ne.s32.totalorder %s54, %s57
      %p63 = scmp.eq.s32.totalorder %s30, 0
      %p64 = por %p62, %p63
      %p65 = scmp.ne.s32.totalorder %s54, %s57
      %p66 = scmp.eq.s32.totalorder %s35, 1
      %p67 = por %p65, %p66
      %p68 = scmp.ne.s32.totalorder %s57, %s58
      %p69 = scmp.eq.s32.totalorder %s35, 0
      %p70 = por %p68, %p69
      %p71 = scmp.ne.s32.totalorder %s57, %s58
      %p72 = scmp.eq.s32.totalorder %s36, 1
      %p73 = por %p71, %p72
      %p75 = scmp.ne.s32.totalorder %s58, %s74
      %p76 = scmp.eq.s32.totalorder %s36, 0
      %p77 = por %p75, %p76
      %s78 = ssub.s32 %s37, %s49
      %p79 = scmp.eq.s32.totalorder %s78, 0
      %s81 = sadd.s32 %s80, 1
      %s82 = scalar_select %p79, %s80, %s81
      %p85 = pneg %p79
      %p86 = scmp.eq.s32.totalorder %s30, 1
      %p87 = por %p85, %p86
      %p88 = scmp.ne.s32.totalorder %s80, %s83
      %p89 = scmp.eq.s32.totalorder %s30, 0
      %p90 = por %p88, %p89
      %p91 = scmp.ne.s32.totalorder %s80, %s83
      %p92 = scmp.eq.s32.totalorder %s35, 1
      %p93 = por %p91, %p92
      %p94 = scmp.ne.s32.totalorder %s83, %s84
      %p95 = scmp.eq.s32.totalorder %s35, 0
      %p96 = por %p94, %p95
      %p97 = scmp.ne.s32.totalorder %s83, %s84
      %p98 = scmp.eq.s32.totalorder %s36, 1
      %p99 = por %p97, %p98
      %p101 = scmp.ne.s32.totalorder %s84, %s100
      %p102 = scmp.eq.s32.totalorder %s36, 0
      %p103 = por %p101, %p102
      %s104 = ssub.s32 %s37, %s49
      %s105 = ssub.s32 %s38, %s45
      %s106 = sor.u32 %s104, %s105
      %p107 = scmp.eq.s32.totalorder %s106, 0
      %s109 = sadd.s32 %s108, 1
      %s110 = scalar_select %p107, %s108, %s109
      %p113 = pneg %p107
      %p114 = scmp.eq.s32.totalorder %s30, 1
      %p115 = por %p113, %p114
      %p116 = scmp.ne.s32.totalorder %s108, %s111
      %p117 = scmp.eq.s32.totalorder %s30, 0
      %p118 = por %p116, %p117
      %p119 = scmp.ne.s32.totalorder %s108, %s111
      %p120 = scmp.eq.s32.totalorder %s35, 1
      %p121 = por %p119, %p120
      %p122 = scmp.ne.s32.totalorder %s111, %s112
      %p123 = scmp.eq.s32.totalorder %s35, 0
      %p124 = por %p122, %p123
      %p125 = scmp.ne.s32.totalorder %s111, %s112
      %p126 = scmp.eq.s32.totalorder %s36, 1
      %p127 = por %p125, %p126
      %p129 = scmp.ne.s32.totalorder %s112, %s128
      %p130 = scmp.eq.s32.totalorder %s36, 0
      %p131 = por %p129, %p130
      %s132 = ssub.s32 %s37, %s49
      %p133 = scmp.eq.s32.totalorder %s132, 0
      %s135 = sadd.s32 %s134, 1
      %s136 = scalar_select %p133, %s134, %s135
      %p139 = pneg %p133
      %p140 = scmp.eq.s32.totalorder %s30, 1
      %p141 = por %p139, %p140
      %p142 = scmp.ne.s32.totalorder %s134, %s137
      %p143 = scmp.eq.s32.totalorder %s30, 0
      %p144 = por %p142, %p143
      %p145 = scmp.ne.s32.totalorder %s134, %s137
      %p146 = scmp.eq.s32.totalorder %s35, 1
      %p147 = por %p145, %p146
      %p148 = scmp.ne.s32.totalorder %s137, %s138
      %p149 = scmp.eq.s32.totalorder %s35, 0
      %p150 = por %p148, %p149
      %p151 = scmp.ne.s32.totalorder %s137, %s138
      %p152 = scmp.eq.s32.totalorder %s36, 1
      %p153 = por %p151, %p152
      %p155 = scmp.ne.s32.totalorder %s138, %s154
      %p156 = scmp.eq.s32.totalorder %s36, 0
      %p157 = por %p155, %p156
      %s159 = sadd.s32 %s158, 1
      %p162 = scmp.eq.s32.totalorder %s30, 1
      %p163 = scmp.ne.s32.totalorder %s158, %s160
      %p164 = scmp.eq.s32.totalorder %s30, 0
      %p165 = por %p163, %p164
      %p166 = scmp.ne.s32.totalorder %s158, %s160
      %p167 = scmp.eq.s32.totalorder %s35, 1
      %p168 = por %p166, %p167
      %p169 = scmp.ne.s32.totalorder %s160, %s161
      %p170 = scmp.eq.s32.totalorder %s35, 0
      %p171 = por %p169, %p170
      %p172 = scmp.ne.s32.totalorder %s160, %s161
      %p173 = scmp.eq.s32.totalorder %s36, 1
      %p174 = por %p172, %p173
      %p176 = scmp.ne.s32.totalorder %s161, %s175
      %p177 = scmp.eq.s32.totalorder %s36, 0
      %p178 = por %p176, %p177
      %s180 = sadd.s32 %s179, 1
      %p183 = scmp.eq.s32.totalorder %s30, 1
      %p184 = scmp.ne.s32.totalorder %s179, %s181
      %p185 = scmp.eq.s32.totalorder %s30, 0
      %p186 = por %p184, %p185
      %p187 = scmp.ne.s32.totalorder %s179, %s181
      %p188 = scmp.eq.s32.totalorder %s35, 1
      %p189 = por %p187, %p188
      %p190 = scmp.ne.s32.totalorder %s181, %s182
      %p191 = scmp.eq.s32.totalorder %s35, 0
      %p192 = por %p190, %p191
      %p193 = scmp.ne.s32.totalorder %s181, %s182
      %p194 = scmp.eq.s32.totalorder %s36, 1
      %p195 = por %p193, %p194
      %p197 = scmp.ne.s32.totalorder %s182, %s196
      %p198 = scmp.eq.s32.totalorder %s36, 0
      %p199 = por %p197, %p198
      %s201 = sadd.s32 %s200, 1
      %p204 = scmp.eq.s32.totalorder %s30, 1
      %p205 = scmp.ne.s32.totalorder %s200, %s202
      %p206 = scmp.eq.s32.totalorder %s30, 0
      %p207 = por %p205, %p206
      %p208 = scmp.ne.s32.totalorder %s200, %s202
      %p209 = scmp.eq.s32.totalorder %s35, 1
      %p210 = por %p208, %p209
      %p211 = scmp.ne.s32.totalorder %s202, %s203
      %p212 = scmp.eq.s32.totalorder %s35, 0
      %p213 = por %p211, %p212
      %p214 = scmp.ne.s32.totalorder %s202, %s203
      %p215 = scmp.eq.s32.totalorder %s36, 1
      %p216 = por %p214, %p215
      %p218 = scmp.ne.s32.totalorder %s203, %s217
      %p219 = scmp.eq.s32.totalorder %s36, 0
      %p220 = por %p218, %p219
      %s222 = sadd.s32 %s221, 1
      %p225 = scmp.eq.s32.totalorder %s30, 1
      %p226 = scmp.ne.s32.totalorder %s221, %s223
      %p227 = scmp.eq.s32.totalorder %s30, 0
      %p228 = por %p226, %p227
      %p229 = scmp.ne.s32.totalorder %s221, %s223
      %p230 = scmp.eq.s32.totalorder %s35, 1
      %p231 = por %p229, %p230
      %p232 = scmp.ne.s32.totalorder %s223, %s224
      %p233 = scmp.eq.s32.totalorder %s35, 0
      %p234 = por %p232, %p233
      %p235 = scmp.ne.s32.totalorder %s223, %s224
      %p236 = scmp.eq.s32.totalorder %s36, 1
      %p237 = por %p235, %p236
      %p239 = scmp.ne.s32.totalorder %s224, %s238
      %p240 = scmp.eq.s32.totalorder %s36, 0
      %p241 = por %p239, %p240
      %s243 = sadd.s32 %s242, 1
      %p246 = scmp.eq.s32.totalorder %s30, 1
      %p247 = scmp.ne.s32.totalorder %s242, %s244
      %p248 = scmp.eq.s32.totalorder %s30, 0
      %p249 = por %p247, %p248
      %p250 = scmp.ne.s32.totalorder %s242, %s244
      %p251 = scmp.eq.s32.totalorder %s35, 1
      %p252 = por %p250, %p251
      %p253 = scmp.ne.s32.totalorder %s244, %s245
      %p254 = scmp.eq.s32.totalorder %s35, 0
      %p255 = por %p253, %p254
      %p256 = scmp.ne.s32.totalorder %s244, %s245
      %p257 = scmp.eq.s32.totalorder %s36, 1
      %p258 = por %p256, %p257
      %p260 = scmp.ne.s32.totalorder %s245, %s259
      %p261 = scmp.eq.s32.totalorder %s36, 0
      %p262 = por %p260, %p261
      %s264 = sadd.s32 %s263, 1
      %p267 = scmp.eq.s32.totalorder %s30, 1
      %p268 = scmp.ne.s32.totalorder %s263, %s265
      %p269 = scmp.eq.s32.totalorder %s30, 0
      %p270 = por %p268, %p269
      %p271 = scmp.ne.s32.totalorder %s263, %s265
      %p272 = scmp.eq.s32.totalorder %s35, 1
      %p273 = por %p271, %p272
      %p274 = scmp.ne.s32.totalorder %s265, %s266
      %p275 = scmp.eq.s32.totalorder %s35, 0
      %p276 = por %p274, %p275
      %p277 = scmp.ne.s32.totalorder %s265, %s266
      %p278 = scmp.eq.s32.totalorder %s36, 1
      %p279 = por %p277, %p278
      %p281 = scmp.ne.s32.totalorder %s266, %s280
      %p282 = scmp.eq.s32.totalorder %s36, 0
      %p283 = por %p281, %p282
      %s285 = sadd.s32 %s284, 1
      %p288 = scmp.eq.s32.totalorder %s30, 1
      %p289 = scmp.ne.s32.totalorder %s284, %s286
      %p290 = scmp.eq.s32.totalorder %s30, 0
      %p291 = por %p289, %p290
      %p292 = scmp.ne.s32.totalorder %s284, %s286
      %p293 = scmp.eq.s32.totalorder %s35, 1
      %p294 = por %p292, %p293
      %p295 = scmp.ne.s32.totalorder %s286, %s287
      %p296 = scmp.eq.s32.totalorder %s35, 0
      %p297 = por %p295, %p296
      %p298 = scmp.ne.s32.totalorder %s286, %s287
      %p299 = scmp.eq.s32.totalorder %s36, 1
      %p300 = por %p298, %p299
      %p302 = scmp.ne.s32.totalorder %s287, %s301
      %p303 = scmp.eq.s32.totalorder %s36, 0
      %p304 = por %p302, %p303
      %s306 = sadd.s32 %s305, 1
      %p309 = scmp.eq.s32.totalorder %s30, 1
      %p310 = scmp.ne.s32.totalorder %s305, %s307
      %p311 = scmp.eq.s32.totalorder %s30, 0
      %p312 = por %p310, %p311
      %p313 = scmp.ne.s32.totalorder %s305, %s307
      %p314 = scmp.eq.s32.totalorder %s35, 1
      %p315 = por %p313, %p314
      %p316 = scmp.ne.s32.totalorder %s307, %s308
      %p317 = scmp.eq.s32.totalorder %s35, 0
      %p318 = por %p316, %p317
      %p319 = scmp.ne.s32.totalorder %s307, %s308
      %p320 = scmp.eq.s32.totalorder %s36, 1
      %p321 = por %p319, %p320
      %p323 = scmp.ne.s32.totalorder %s308, %s322
      %p324 = scmp.eq.s32.totalorder %s36, 0
      %p325 = por %p323, %p324
      %s327 = sadd.s32 %s326, 1
      %p330 = scmp.eq.s32.totalorder %s30, 1
      %p331 = scmp.ne.s32.totalorder %s326, %s328
      %p332 = scmp.eq.s32.totalorder %s30, 0
      %p333 = por %p331, %p332
      %p334 = scmp.ne.s32.totalorder %s326, %s328
      %p335 = scmp.eq.s32.totalorder %s35, 1
      %p336 = por %p334, %p335
      %p337 = scmp.ne.s32.totalorder %s328, %s329
      %p338 = scmp.eq.s32.totalorder %s35, 0
      %p339 = por %p337, %p338
      %p340 = scmp.ne.s32.totalorder %s328, %s329
      %p341 = scmp.eq.s32.totalorder %s36, 1
      %p342 = por %p340, %p341
      %p344 = scmp.ne.s32.totalorder %s329, %s343
      %p345 = scmp.eq.s32.totalorder %s36, 0
      %p346 = por %p344, %p345
      %s348 = sadd.s32 %s347, 1
      %p351 = scmp.eq.s32.totalorder %s30, 1
      %p352 = scmp.ne.s32.totalorder %s347, %s349
      %p353 = scmp.eq.s32.totalorder %s30, 0
      %p354 = por %p352, %p353
      %p355 = scmp.ne.s32.totalorder %s347, %s349
      %p356 = scmp.eq.s32.totalorder %s35, 1
      %p357 = por %p355, %p356
      %p358 = scmp.ne.s32.totalorder %s349, %s350
      %p359 = scmp.eq.s32.totalorder %s35, 0
      %p360 = por %p358, %p359
      %p361 = scmp.ne.s32.totalorder %s349, %s350
      %p362 = scmp.eq.s32.totalorder %s36, 1
      %p363 = por %p361, %p362
      %p365 = scmp.ne.s32.totalorder %s350, %s364
      %p366 = scmp.eq.s32.totalorder %s36, 0
      %p367 = por %p365, %p366
      %s369 = sadd.s32 %s368, 1
      %p372 = scmp.eq.s32.totalorder %s30, 1
      %p373 = scmp.ne.s32.totalorder %s368, %s370
      %p374 = scmp.eq.s32.totalorder %s30, 0
      %p375 = por %p373, %p374
      %p376 = scmp.ne.s32.totalorder %s368, %s370
      %p377 = scmp.eq.s32.totalorder %s35, 1
      %p378 = por %p376, %p377
      %p379 = scmp.ne.s32.totalorder %s370, %s371
      %p380 = scmp.eq.s32.totalorder %s35, 0
      %p381 = por %p379, %p380
      %p382 = scmp.ne.s32.totalorder %s370, %s371
      %p383 = scmp.eq.s32.totalorder %s36, 1
      %p384 = por %p382, %p383
      %p386 = scmp.ne.s32.totalorder %s371, %s385
      %p387 = scmp.eq.s32.totalorder %s36, 0
      %p388 = por %p386, %p387
      %s390 = sadd.s32 %s389, 1
      %p393 = scmp.eq.s32.totalorder %s30, 1
      %p394 = scmp.ne.s32.totalorder %s389, %s391
      %p395 = scmp.eq.s32.totalorder %s30, 0
      %p396 = por %p394, %p395
      %p397 = scmp.ne.s32.totalorder %s389, %s391
      %p398 = scmp.eq.s32.totalorder %s35, 1
      %p399 = por %p397, %p398
      %p400 = scmp.ne.s32.totalorder %s391, %s392
      %p401 = scmp.eq.s32.totalorder %s35, 0
      %p402 = por %p400, %p401
      %p403 = scmp.ne.s32.totalorder %s391, %s392
      %p404 = scmp.eq.s32.totalorder %s36, 1
      %p405 = por %p403, %p404
      %p407 = scmp.ne.s32.totalorder %s392, %s406
      %p408 = scmp.eq.s32.totalorder %s36, 0
      %p409 = por %p407, %p408
      %s411 = sadd.s32 %s410, 1
      %p414 = scmp.eq.s32.totalorder %s30, 1
      %p415 = scmp.ne.s32.totalorder %s410, %s412
      %p416 = scmp.eq.s32.totalorder %s30, 0
      %p417 = por %p415, %p416
      %p418 = scmp.ne.s32.totalorder %s410, %s412
      %p419 = scmp.eq.s32.totalorder %s35, 1
      %p420 = por %p418, %p419
      %p421 = scmp.ne.s32.totalorder %s412, %s413
      %p422 = scmp.eq.s32.totalorder %s35, 0
      %p423 = por %p421, %p422
      %p424 = scmp.ne.s32.totalorder %s412, %s413
      %p425 = scmp.eq.s32.totalorder %s36, 1
      %p426 = por %p424, %p425
      %p428 = scmp.ne.s32.totalorder %s413, %s427
      %p429 = scmp.eq.s32.totalorder %s36, 0
      %p430 = por %p428, %p429
      %s432 = sadd.s32 %s431, 1
      %p435 = scmp.eq.s32.totalorder %s30, 1
      %p436 = scmp.ne.s32.totalorder %s431, %s433
      %p437 = scmp.eq.s32.totalorder %s30, 0
      %p438 = por %p436, %p437
      %p439 = scmp.ne.s32.totalorder %s431, %s433
      %p440 = scmp.eq.s32.totalorder %s35, 1
      %p441 = por %p439, %p440
      %p442 = scmp.ne.s32.totalorder %s433, %s434
      %p443 = scmp.eq.s32.totalorder %s35, 0
      %p444 = por %p442, %p443
      %p445 = scmp.ne.s32.totalorder %s433, %s434
      %p446 = scmp.eq.s32.totalorder %s36, 1
      %p447 = por %p445, %p446
      %p449 = scmp.ne.s32.totalorder %s434, %s448
      %p450 = scmp.eq.s32.totalorder %s36, 0
      %p451 = por %p449, %p450
      %s452 = ssub.s32 %s37, %s49
      %s453 = ssub.s32 %s38, %s45
      %s454 = sor.u32 %s452, %s453
      %p455 = scmp.eq.s32.totalorder %s454, 0
      %s457 = sadd.s32 %s456, 1
      %s458 = scalar_select %p455, %s456, %s457
      %p461 = pneg %p455
      %p462 = scmp.eq.s32.totalorder %s30, 1
      %p463 = por %p461, %p462
      %p464 = scmp.ne.s32.totalorder %s456, %s459
      %p465 = scmp.eq.s32.totalorder %s30, 0
      %p466 = por %p464, %p465
      %p467 = scmp.ne.s32.totalorder %s456, %s459
      %p468 = scmp.eq.s32.totalorder %s35, 1
      %p469 = por %p467, %p468
      %p470 = scmp.ne.s32.totalorder %s459, %s460
      %p471 = scmp.eq.s32.totalorder %s35, 0
      %p472 = por %p470, %p471
      %p473 = scmp.ne.s32.totalorder %s459, %s460
      %p474 = scmp.eq.s32.totalorder %s36, 1
      %p475 = por %p473, %p474
      %p477 = scmp.ne.s32.totalorder %s460, %s476
      %p478 = scmp.eq.s32.totalorder %s36, 0
      %p479 = por %p477, %p478
      %p480 = scmp.le.s32.totalorder 1, %s30
      %p481 = scmp.lt.s32.totalorder %s30, 3
      %p482 = pnand %p480, %p481
      %p483 = pneg %p482
      // Predicated region
      $region9: #{tpu_custom_call.1} parent=5 // pred_check
        _
      $region10: #{tpu_custom_call.1} parent=5 // pred_check_branch
        %485 = sbr.rel (%p482) target = $region12
      $region11: #{tpu_custom_call.1} parent=5 // pred_region
        %s486 = ssub.s32 %s30, 1
        // Predicated region
        $region13: #{tpu_custom_call.1} parent=11 // pred_check
          %p487 = pneg %p171
        $region14: #{tpu_custom_call.1} parent=11 // pred_check_branch
          %489 = sbr.rel (%p487) target = $region16
        $region15: #{tpu_custom_call.1} parent=11 // pred_region
          _
        $region16: #{tpu_custom_call.1} parent=11 // pred_fallthru
          _
        // Predicated region
        $region17: #{tpu_custom_call.1} parent=11 // pred_check
          %p490 = pneg %p192
        $region18: #{tpu_custom_call.1} parent=11 // pred_check_branch
          %492 = sbr.rel (%p490) target = $region20
        $region19: #{tpu_custom_call.1} parent=11 // pred_region
          _
        $region20: #{tpu_custom_call.1} parent=11 // pred_fallthru
          _
        // Predicated region
        $region21: #{tpu_custom_call.1} parent=11 // pred_check
          %p493 = pneg %p213
        $region22: #{tpu_custom_call.1} parent=11 // pred_check_branch
          %495 = sbr.rel (%p493) target = $region24
        $region23: #{tpu_custom_call.1} parent=11 // pred_region
          %497 = vsyncadd [#allocation3], 0
          %s498 = sshll.u32 %s6, 4
          %s499 = int_to_ptr.hbm [resolvable:$true] %s498
          %s500 = sshll.u32 [#allocation2], 4
          %s501 = int_to_ptr.vmem [resolvable:$true] %s500
          %506 = dma.hbm_to_vmem [thread:$0]  %s499, 256, %s501, [#allocation3], 64, 64, 4
        $region24: #{tpu_custom_call.1} parent=11 // pred_fallthru
          _
        // Predicated region
        $region25: #{tpu_custom_call.1} parent=11 // pred_check
          %p507 = pneg %p234
        $region26: #{tpu_custom_call.1} parent=11 // pred_check_branch
          %509 = sbr.rel (%p507) target = $region28
        $region27: #{tpu_custom_call.1} parent=11 // pred_region
          _
        $region28: #{tpu_custom_call.1} parent=11 // pred_fallthru
          _
        // Predicated region
        $region29: #{tpu_custom_call.1} parent=11 // pred_check
          %p510 = pneg %p255
        $region30: #{tpu_custom_call.1} parent=11 // pred_check_branch
          %512 = sbr.rel (%p510) target = $region32
        $region31: #{tpu_custom_call.1} parent=11 // pred_region
          %514 = vsyncadd [#allocation6], 0
          %s515 = sshll.u32 %s8, 4
          %s516 = int_to_ptr.hbm [resolvable:$true] %s515
          %s517 = sshll.u32 [#allocation5], 4
          %s518 = int_to_ptr.vmem [resolvable:$true] %s517
          %523 = dma.hbm_to_vmem [thread:$0]  %s516, 256, %s518, [#allocation6], 64, 64, 4
        $region32: #{tpu_custom_call.1} parent=11 // pred_fallthru
          _
        // Predicated region
        $region33: #{tpu_custom_call.1} parent=11 // pred_check
          %p524 = pneg %p276
        $region34: #{tpu_custom_call.1} parent=11 // pred_check_branch
          %526 = sbr.rel (%p524) target = $region36
        $region35: #{tpu_custom_call.1} parent=11 // pred_region
          _
        $region36: #{tpu_custom_call.1} parent=11 // pred_fallthru
          _
        // Predicated region
        $region37: #{tpu_custom_call.1} parent=11 // pred_check
          %p527 = pneg %p297
        $region38: #{tpu_custom_call.1} parent=11 // pred_check_branch
          %529 = sbr.rel (%p527) target = $region40
        $region39: #{tpu_custom_call.1} parent=11 // pred_region
          %531 = vsyncadd [#allocation6], 0
          %s532 = sshll.u32 %s10, 4
          %s533 = int_to_ptr.hbm [resolvable:$true] %s532
          %s534 = sshll.u32 [#allocation7], 4
          %s535 = int_to_ptr.vmem [resolvable:$true] %s534
          %540 = dma.hbm_to_vmem [thread:$0]  %s533, 256, %s535, [#allocation6], 64, 64, 4
        $region40: #{tpu_custom_call.1} parent=11 // pred_fallthru
          _
        // Predicated region
        $region41: #{tpu_custom_call.1} parent=11 // pred_check
          %p541 = pneg %p318
        $region42: #{tpu_custom_call.1} parent=11 // pred_check_branch
          %543 = sbr.rel (%p541) target = $region44
        $region43: #{tpu_custom_call.1} parent=11 // pred_region
          _
        $region44: #{tpu_custom_call.1} parent=11 // pred_fallthru
          _
        // Predicated region
        $region45: #{tpu_custom_call.1} parent=11 // pred_check
          %p544 = pneg %p339
        $region46: #{tpu_custom_call.1} parent=11 // pred_check_branch
          %546 = sbr.rel (%p544) target = $region48
        $region47: #{tpu_custom_call.1} parent=11 // pred_region
          _
        $region48: #{tpu_custom_call.1} parent=11 // pred_fallthru
          _
        // Predicated region
        $region49: #{tpu_custom_call.1} parent=11 // pred_check
          %p547 = pneg %p360
        $region50: #{tpu_custom_call.1} parent=11 // pred_check_branch
          %549 = sbr.rel (%p547) target = $region52
        $region51: #{tpu_custom_call.1} parent=11 // pred_region
          _
        $region52: #{tpu_custom_call.1} parent=11 // pred_fallthru
          _
        // Predicated region
        $region53: #{tpu_custom_call.1} parent=11 // pred_check
          %p550 = pneg %p381
        $region54: #{tpu_custom_call.1} parent=11 // pred_check_branch
          %552 = sbr.rel (%p550) target = $region56
        $region55: #{tpu_custom_call.1} parent=11 // pred_region
          %554 = vsyncadd [#allocation9], 0
          %s555 = sshll.u32 %s14, 4
          %s556 = int_to_ptr.hbm [resolvable:$true] %s555
          %s557 = sshll.u32 [#allocation8], 4
          %s558 = int_to_ptr.vmem [resolvable:$true] %s557
          %563 = dma.hbm_to_vmem [thread:$0]  %s556, 256, %s558, [#allocation9], 64, 64, 4
        $region56: #{tpu_custom_call.1} parent=11 // pred_fallthru
          _
        // Predicated region
        $region57: #{tpu_custom_call.1} parent=11 // pred_check
          %p564 = pneg %p402
        $region58: #{tpu_custom_call.1} parent=11 // pred_check_branch
          %566 = sbr.rel (%p564) target = $region60
        $region59: #{tpu_custom_call.1} parent=11 // pred_region
          _
        $region60: #{tpu_custom_call.1} parent=11 // pred_fallthru
          _
        // Predicated region
        $region61: #{tpu_custom_call.1} parent=11 // pred_check
          %p567 = pneg %p423
        $region62: #{tpu_custom_call.1} parent=11 // pred_check_branch
          %569 = sbr.rel (%p567) target = $region64
        $region63: #{tpu_custom_call.1} parent=11 // pred_region
          _
        $region64: #{tpu_custom_call.1} parent=11 // pred_fallthru
          _
        // Predicated region
        $region65: #{tpu_custom_call.1} parent=11 // pred_check
          %p570 = pneg %p444
        $region66: #{tpu_custom_call.1} parent=11 // pred_check_branch
          %572 = sbr.rel (%p570) target = $region68
        $region67: #{tpu_custom_call.1} parent=11 // pred_region
          _
        $region68: #{tpu_custom_call.1} parent=11 // pred_fallthru
          _
      $region12: #{tpu_custom_call.1} parent=5 // pred_fallthru
        _
      %p573 = scmp.lt.s32.totalorder %s30, 2
      // Predicated region
      $region69: #{tpu_custom_call.1} parent=5 // pred_check
        %p574 = pneg %p573
      $region70: #{tpu_custom_call.1} parent=5 // pred_check_branch
        %576 = sbr.rel (%p574) target = $region72
      $region71: #{tpu_custom_call.1} parent=5 // pred_region
        // Predicated region
        $region73: #{tpu_custom_call.1} parent=71 // pred_check
          %p577 = pneg %p64
        $region74: #{tpu_custom_call.1} parent=71 // pred_check_branch
          %579 = sbr.rel (%p577) target = $region76
        $region75: #{tpu_custom_call.1} parent=71 // pred_region
          %p580 = scmp.lt.s32.totalorder %s37, 1
          %s581 = scalar_select %p580, %s37, 1
          %p582 = scmp.lt.s32.totalorder %s38, 0
          %s583 = scalar_select %p582, %s38, 0
          %s584 = sadd.s32 %s583, %s581
          %s585 = smul.addr %s584, 8
          %s586 = scalar_lea.vmem %s0, %s585
        $region76: #{tpu_custom_call.1} parent=71 // pred_fallthru
          _
        // Predicated region
        $region77: #{tpu_custom_call.1} parent=71 // pred_check
          %p587 = pneg %p90
        $region78: #{tpu_custom_call.1} parent=71 // pred_check_branch
          %589 = sbr.rel (%p587) target = $region80
        $region79: #{tpu_custom_call.1} parent=71 // pred_region
          %p590 = scmp.lt.s32.totalorder %s37, 1
          %s591 = scalar_select %p590, %s37, 1
          %s592 = smul.addr %s591, 8
          %s593 = scalar_lea.vmem %s1, %s592
        $region80: #{tpu_custom_call.1} parent=71 // pred_fallthru
          _
        // Predicated region
        $region81: #{tpu_custom_call.1} parent=71 // pred_check
          %p594 = pneg %p118
        $region82: #{tpu_custom_call.1} parent=71 // pred_check_branch
          %596 = sbr.rel (%p594) target = $region84
        $region83: #{tpu_custom_call.1} parent=71 // pred_region
          %p597 = scmp.lt.s32.totalorder %s37, 1
          %s598 = scalar_select %p597, %s37, 1
          %p599 = scmp.lt.s32.totalorder %s38, 0
          %s600 = scalar_select %p599, %s38, 0
          %s601 = sadd.s32 %s600, %s598
          %s602 = smul.addr %s601, 8
          %s603 = scalar_lea.vmem %s2, %s602
        $region84: #{tpu_custom_call.1} parent=71 // pred_fallthru
          _
        // Predicated region
        $region85: #{tpu_custom_call.1} parent=71 // pred_check
          %p604 = pneg %p144
        $region86: #{tpu_custom_call.1} parent=71 // pred_check_branch
          %606 = sbr.rel (%p604) target = $region88
        $region87: #{tpu_custom_call.1} parent=71 // pred_region
          %p607 = scmp.lt.s32.totalorder %s37, 1
          %s608 = scalar_select %p607, %s37, 1
          %s609 = scalar_lea.vmem %s3, %s608
        $region88: #{tpu_custom_call.1} parent=71 // pred_fallthru
          _
      $region72: #{tpu_custom_call.1} parent=5 // pred_fallthru
        _
      %p610 = scmp.le.s32.totalorder 1, %s30
      %p611 = scmp.lt.s32.totalorder %s30, 3
      %p612 = pnand %p610, %p611
      %p613 = pneg %p612
      // Predicated region
      $region89: #{tpu_custom_call.1} parent=5 // pred_check
        _
      $region90: #{tpu_custom_call.1} parent=5 // pred_check_branch
        %615 = sbr.rel (%p612) target = $region92
      $region91: #{tpu_custom_call.1} parent=5 // pred_region
        %s616 = ssub.s32 %s30, 1
        // Predicated region
        $region93: #{tpu_custom_call.1} parent=91 // pred_check
          %p617 = pneg %p213
        $region94: #{tpu_custom_call.1} parent=91 // pred_check_branch
          %619 = sbr.rel (%p617) target = $region96
        $region95: #{tpu_custom_call.1} parent=91 // pred_region
          %621 = dma.done [#allocation3], 256
        $region96: #{tpu_custom_call.1} parent=91 // pred_fallthru
          _
        // Predicated region
        $region97: #{tpu_custom_call.1} parent=91 // pred_check
          %p622 = pneg %p255
        $region98: #{tpu_custom_call.1} parent=91 // pred_check_branch
          %624 = sbr.rel (%p622) target = $region100
        $region99: #{tpu_custom_call.1} parent=91 // pred_region
          %626 = dma.done [#allocation6], 256
        $region100: #{tpu_custom_call.1} parent=91 // pred_fallthru
          _
        // Predicated region
        $region101: #{tpu_custom_call.1} parent=91 // pred_check
          %p627 = pneg %p297
        $region102: #{tpu_custom_call.1} parent=91 // pred_check_branch
          %629 = sbr.rel (%p627) target = $region104
        $region103: #{tpu_custom_call.1} parent=91 // pred_region
          %631 = dma.done [#allocation6], 256
        $region104: #{tpu_custom_call.1} parent=91 // pred_fallthru
          _
        // Predicated region
        $region105: #{tpu_custom_call.1} parent=91 // pred_check
          %p632 = pneg %p381
        $region106: #{tpu_custom_call.1} parent=91 // pred_check_branch
          %634 = sbr.rel (%p632) target = $region108
        $region107: #{tpu_custom_call.1} parent=91 // pred_region
          %636 = dma.done [#allocation9], 256
        $region108: #{tpu_custom_call.1} parent=91 // pred_fallthru
          _
        %p637 = scmp.lt.s32.totalorder %s39, 1
        %s638 = scalar_select %p637, %s39, 1
        %p639 = scmp.lt.s32.totalorder %s40, 0
        %s640 = scalar_select %p639, %s40, 0
        %s641 = sadd.s32 %s640, %s638
        %s642 = smul.addr %s641, 8
        %s643 = scalar_lea.vmem %s0, %s642
        %p644 = pneg %p70
        %p645 = pneg %p67
        %p646 = scmp.lt.s32.totalorder %s39, 1
        %s647 = scalar_select %p646, %s39, 1
        %s648 = smul.addr %s647, 8
        %s649 = scalar_lea.vmem %s1, %s648
        %p650 = pneg %p96
        %p651 = pneg %p93
        %p652 = scmp.lt.s32.totalorder %s39, 1
        %s653 = scalar_select %p652, %s39, 1
        %p654 = scmp.lt.s32.totalorder %s40, 0
        %s655 = scalar_select %p654, %s40, 0
        %s656 = sadd.s32 %s655, %s653
        %s657 = smul.addr %s656, 8
        %s658 = scalar_lea.vmem %s2, %s657
        %p659 = pneg %p124
        %p660 = pneg %p121
        %p661 = scmp.lt.s32.totalorder %s39, 1
        %s662 = scalar_select %p661, %s39, 1
        %s663 = scalar_lea.vmem %s3, %s662
        %p664 = pneg %p150
        %p665 = pneg %p147
        %p666 = pneg %p171
        %p667 = pneg %p168
        %p668 = pneg %p192
        %p669 = pneg %p189
        %p670 = pneg %p213
        %p671 = pneg %p210
        %p672 = pneg %p234
        %p673 = pneg %p231
        %p674 = pneg %p255
        %p675 = pneg %p252
        %p676 = pneg %p276
        %p677 = pneg %p273
        %p678 = pneg %p297
        %p679 = pneg %p294
        %p680 = pneg %p318
        %p681 = pneg %p315
        %p682 = pneg %p339
        %p683 = pneg %p336
        %p684 = pneg %p360
        %p685 = pneg %p357
        %p686 = pneg %p381
        %p687 = pneg %p378
        %p688 = pneg %p402
        %p689 = pneg %p399
        %p690 = pneg %p423
        %p691 = pneg %p420
        %p692 = pneg %p444
        %p693 = pneg %p441
        %p694 = pneg %p472
        %p695 = pneg %p469
        %s696 = sand.u32 %s459, 1
        %s697 = scalar_lea.sflag [#allocation4], %s696
        %s698 = sand.u32 %s459, 1
        %s699 = smul.addr %s698, 8
        %s700 = scalar_lea.vmem [#allocation10], %s699
        %p701 = scmp.lt.s32.totalorder %s39, 1
        %s702 = scalar_select %p701, %s39, 1
        %p703 = scmp.lt.s32.totalorder %s40, 0
        %s704 = scalar_select %p703, %s40, 0
        %s705 = sadd.s32 %s704, %s702
        %s706 = smul.addr %s705, 8
        %s707 = scalar_lea.vmem %s0, %s706
        %p708 = scmp.lt.s32.totalorder %s39, 1
        %s709 = scalar_select %p708, %s39, 1
        %s710 = smul.addr %s709, 8
        %s711 = scalar_lea.vmem %s1, %s710
        %p712 = scmp.lt.s32.totalorder %s39, 1
        %s713 = scalar_select %p712, %s39, 1
        %p714 = scmp.lt.s32.totalorder %s40, 0
        %s715 = scalar_select %p714, %s40, 0
        %s716 = sadd.s32 %s715, %s713
        %s717 = smul.addr %s716, 8
        %s718 = scalar_lea.vmem %s2, %s717
        %p719 = scmp.lt.s32.totalorder %s39, 1
        %s720 = scalar_select %p719, %s39, 1
        %s721 = scalar_lea.vmem %s3, %s720
        %v723 = vld [vmem:[%s707] sm:$0xff]
        %v724 = vld [vmem:[%s4] sm:$0x1]
        %v725 = vld [vmem:[%s5] sm:$0x1]
        %vm726 = vcmask 261120
        %v727 = vsel %vm726, %v723, 0.0
        %728 = vadd.xlane.f32.xlu0 %v727
        %v729 = vpop.xlane.xlu0 %728
        %v730 = vrcp.pop 32.0
        %v731 = vmul.f32 32.0, %v730
        %v732 = vsub.f32 1.0, %v731
        %v733 = vmul.f32 %v730, %v732
        %v734 = vadd.f32 %v730, %v733
        %vm735 = vweird.f32 %v730
        %v736 = vsel %vm735, %v730, %v734
        %v737 = vmul.f32 %v729, %v736
        %v738 = vsub.f32 %v723, %v737
        %v739 = vmul.f32 %v738, %v738
        %v740 = vsel %vm726, %v739, 0.0
        %741 = vadd.xlane.f32.xlu0 %v740
        %v742 = vpop.xlane.xlu0 %741
        %v743 = vmul.f32 %v742, %v736
        %v744 = vadd.f32 %v743, 1e-05
        %v745 = vrsqrt.pop %v744
        %v746 = vmul.f32 %v745, %v744
        %v747 = vmul.f32 %v746, %v745
        %v748 = vmul.f32 0.5, %v747
        %v749 = vsub.f32 1.5, %v748
        %v750 = vmul.f32 %v745, %v749
        %vm751 = vweird.f32 %v744
        %vm752 = vweird.f32 %v745
        %vm753 = vmor %vm751, %vm752
        %v754 = vsel %vm753, %v745, %v750
        %v755 = vmul.f32 %v738, %v754
        %v757 = vperm.slane %v724, 0
        %v759 = vmul.f32 %v755, %v757
        %v761 = vperm.slane %v725, 0
        %v763 = vadd.f32 %v759, %v761
        %v764 = vpack.c.bf16 %v763, %v763
        %v765 = vld [vmem:[%s711] sm:$0xff]
        %v766 = vsel %vm726, %v765, 0.0
        %767 = vadd.xlane.f32.xlu0 %v766
        %v768 = vpop.xlane.xlu0 %767
        %v769 = vmul.f32 %v768, %v736
        %v770 = vsub.f32 %v765, %v769
        %v771 = vmul.f32 %v770, %v770
        %v772 = vsel %vm726, %v771, 0.0
        %773 = vadd.xlane.f32.xlu0 %v772
        %v774 = vpop.xlane.xlu0 %773
        %v775 = vmul.f32 %v774, %v736
        %v776 = vadd.f32 %v775, 1e-05
        %v777 = vrsqrt.pop %v776
        %v778 = vmul.f32 %v777, %v776
        %v779 = vmul.f32 %v778, %v777
        %v780 = vmul.f32 0.5, %v779
        %v781 = vsub.f32 1.5, %v780
        %v782 = vmul.f32 %v777, %v781
        %vm783 = vweird.f32 %v776
        %vm784 = vweird.f32 %v777
        %vm785 = vmor %vm783, %vm784
        %v786 = vsel %vm785, %v777, %v782
        %v787 = vmul.f32 %v770, %v786
        %v788 = vmul.f32 %v787, %v757
        %v789 = vadd.f32 %v788, %v761
        %v790 = vpack.c.bf16 %v789, %v789
        %v791 = vld [vmem:[#allocation2] sm:$0xf]
        %v792 = vld [vmem:[#allocation2 + $0x4] sm:$0xf]
        %v793 = vld [vmem:[#allocation2 + $0x8] sm:$0xf]
        %v794 = vld [vmem:[#allocation2 + $0xc] sm:$0xf]
        %v795 = vld [vmem:[%s7] sm:$0x1]
        %v797 = vperm.slane %v795, 0
        %v803 = vunpack.c.l.b16 %v791
        %v804 = vunpack.c.l.b16 %v792
        %v805 = vunpack.c.l.b16 %v793
        %v806 = vunpack.c.l.b16 %v794
        %v807 = vpack.c.b16 %v804, %v803
        %v808 = vpack.c.b16 %v806, %v805
        %v812 = vsel %vm726, %v764, 0
        %814 = vmatpush.bf16.msra.mxu0 0
        %815 = vmatpush.bf16.msra.mxu0 0
        %816 = vmatpush.bf16.msra.mxu0 0
        %817 = vmatpush.bf16.msra.mxu0 0
        %818 = vmatpush.bf16.msra.mxu0 0
        %819 = vmatpush.bf16.msra.mxu0 0
        %820 = vmatpush.bf16.msra.mxu0 %v808
        %821 = vmatpush.bf16.msra.mxu0 %v807
        %822 = vmatmul.bf16.gmra.mxu0 %v812
        %v823 = vpop.f32.mrf.mxu0
        %v824 = vadd.f32 %v797, %v823
        %v825 = vpop.f32.mrf.mxu0
        %826 = vdwg.mxu0
        %v827 = vld [vmem:[#allocation5] sm:$0xf]
        %v828 = vld [vmem:[#allocation5 + $0x4] sm:$0xf]
        %v829 = vld [vmem:[#allocation5 + $0x8] sm:$0xf]
        %v830 = vld [vmem:[#allocation5 + $0xc] sm:$0xf]
        %v831 = vld [vmem:[%s9] sm:$0x1]
        %v833 = vperm.slane %v831, 0
        %v839 = vunpack.c.l.b16 %v827
        %v840 = vunpack.c.l.b16 %v828
        %v841 = vunpack.c.l.b16 %v829
        %v842 = vunpack.c.l.b16 %v830
        %v843 = vpack.c.b16 %v840, %v839
        %v844 = vpack.c.b16 %v842, %v841
        %v848 = vsel %vm726, %v790, 0
        %850 = vmatpush.bf16.msra.mxu0 0
        %851 = vmatpush.bf16.msra.mxu0 0
        %852 = vmatpush.bf16.msra.mxu0 0
        %853 = vmatpush.bf16.msra.mxu0 0
        %854 = vmatpush.bf16.msra.mxu0 0
        %855 = vmatpush.bf16.msra.mxu0 0
        %856 = vmatpush.bf16.msra.mxu0 %v844
        %857 = vmatpush.bf16.msra.mxu0 %v843
        %858 = vmatmul.bf16.gmra.mxu0 %v848
        %v859 = vpop.f32.mrf.mxu0
        %v860 = vadd.f32 %v833, %v859
        %v861 = vpop.f32.mrf.mxu0
        %862 = vdwg.mxu0
        %v863 = vpack.c.bf16 %v824, %v824
        %v864 = vpack.c.bf16 %v860, %v860
        %v865 = vld [vmem:[%s718] sm:$0xff]
        %vm866 = vcmp.ne.f32.partialorder %v865, 0.0
        %v867 = vld [vmem:[%s721] sm:$0x1]
        %vm868 = vcmp.ne.f32.partialorder %v867, 0.0
        %v869 = vsel %vm868, 1, 0
        %v870 = vperm.slane %v869, 0
        %vm871 = vcmp.eq.s32.totalorder %v870, 1
        %vm872 = vmand %vm866, %vm871
        %vm873 = vcmask 64512
        %v875 = vsel %vm873, %v863, 0
        %v878 = vsel %vm873, %v864, 0
        %880 = vmatpush.bf16.xpose.msra.mxu0 0
        %881 = vmatpush.bf16.xpose.msra.mxu0 0
        %882 = vmatpush.bf16.xpose.msra.mxu0 0
        %883 = vmatpush.bf16.xpose.msra.mxu0 0
        %884 = vmatpush.bf16.xpose.msra.mxu0 0
        %885 = vmatpush.bf16.xpose.msra.mxu0 0
        %886 = vmatpush.bf16.xpose.msra.mxu0 0
        %887 = vmatpush.bf16.xpose.msra.mxu0 %v878
        %888 = vmatmul.bf16.gmra.mxu0 %v875
        %v889 = vpop.f32.mrf.mxu0
        %v890 = vadd.f32 0.0, %v889
        %v891 = vpop.f32.mrf.mxu0
        %892 = vdwg.mxu0
        %v893 = vmul.f32 %v890, 0.35355338
        %v894 = vsel %vm872, %v893, -1000000.0
        %v895 = vsel %vm873, %v894, -inf
        %896 = vmax.xlane.f32.xlu0 %v895
        %v897 = vpop.xlane.xlu0 %896
        %v898 = vsub.f32 %v894, %v897
        %v899 = vmul.f32 %v898, 1.442695
        %v900 = vpow.pop %v899
        %v901 = vsel %vm873, %v900, 0.0
        %902 = vadd.xlane.f32.xlu0 %v901
        %v903 = vpop.xlane.xlu0 %902
        %v904 = vrcp.pop %v903
        %v905 = vmul.f32 %v900, %v904
        %v906 = vpack.c.bf16 %v905, %v905
        %v908 = vunpack.c.l.b16 %v864
        %v909 = vpack.c.b16 %v908, %v908
        %910 = vrot.lane.b32.xlu0 %v909, 96
        %v911 = vpop.permute.xlu0 %910
        %v913 = vsel %vm873, %v906, 0
        %vm915 = vcmask 1043456
        %v917 = vsel %vm915, %v911, 0
        %919 = vmatpush.bf16.msra.mxu0 0
        %920 = vmatpush.bf16.msra.mxu0 0
        %921 = vmatpush.bf16.msra.mxu0 0
        %922 = vmatpush.bf16.msra.mxu0 0
        %923 = vmatpush.bf16.msra.mxu0 0
        %924 = vmatpush.bf16.msra.mxu0 0
        %925 = vmatpush.bf16.msra.mxu0 0
        %926 = vmatpush.bf16.msra.mxu0 %v917
        %927 = vmatmul.bf16.gmra.mxu0 %v913
        %v928 = vpop.f32.mrf.mxu0
        %v929 = vadd.f32 0.0, %v928
        %v930 = vpop.f32.mrf.mxu0
        %931 = vdwg.mxu0
        %v932 = vpack.c.bf16 %v929, %v929
        %v933 = vld [vmem:[#allocation7] sm:$0xf]
        %v935 = vunpack.c.l.b16 %v863
        %v936 = vpack.c.b16 %v935, %v935
        %937 = vrot.lane.b32.xlu0 %v936, 120
        %v938 = vpop.permute.xlu0 %937
        %939 = vrot.lane.b32.xlu0 %v909, 120
        %v940 = vpop.permute.xlu0 %939
        %v942 = vsel %vm873, %v938, 0
        %v945 = vsel %vm873, %v940, 0
        %947 = vmatpush.bf16.xpose.msra.mxu0 0
        %948 = vmatpush.bf16.xpose.msra.mxu0 0
        %949 = vmatpush.bf16.xpose.msra.mxu0 0
        %950 = vmatpush.bf16.xpose.msra.mxu0 0
        %951 = vmatpush.bf16.xpose.msra.mxu0 0
        %952 = vmatpush.bf16.xpose.msra.mxu0 0
        %953 = vmatpush.bf16.xpose.msra.mxu0 0
        %954 = vmatpush.bf16.xpose.msra.mxu0 %v945
        %955 = vmatmul.bf16.gmra.mxu0 %v942
        %v956 = vpop.f32.mrf.mxu0
        %v957 = vadd.f32 0.0, %v956
        %v958 = vpop.f32.mrf.mxu0
        %959 = vdwg.mxu0
        %v960 = vmul.f32 %v957, 0.35355338
        %v961 = vsel %vm872, %v960, -1000000.0
        %v962 = vsel %vm873, %v961, -inf
        %963 = vmax.xlane.f32.xlu0 %v962
        %v964 = vpop.xlane.xlu0 %963
        %v965 = vsub.f32 %v961, %v964
        %v966 = vmul.f32 %v965, 1.442695
        %v967 = vpow.pop %v966
        %v968 = vsel %vm873, %v967, 0.0
        %969 = vadd.xlane.f32.xlu0 %v968
        %v970 = vpop.xlane.xlu0 %969
        %v971 = vrcp.pop %v970
        %v972 = vmul.f32 %v967, %v971
        %v973 = vpack.c.bf16 %v972, %v972
        %974 = vrot.lane.b32.xlu0 %v909, 88
        %v975 = vpop.permute.xlu0 %974
        %v977 = vsel %vm873, %v973, 0
        %v980 = vsel %vm915, %v975, 0
        %982 = vmatpush.bf16.msra.mxu0 0
        %983 = vmatpush.bf16.msra.mxu0 0
        %984 = vmatpush.bf16.msra.mxu0 0
        %985 = vmatpush.bf16.msra.mxu0 0
        %986 = vmatpush.bf16.msra.mxu0 0
        %987 = vmatpush.bf16.msra.mxu0 0
        %988 = vmatpush.bf16.msra.mxu0 0
        %989 = vmatpush.bf16.msra.mxu0 %v980
        %990 = vmatmul.bf16.gmra.mxu0 %v977
        %v991 = vpop.f32.mrf.mxu0
        %v992 = vadd.f32 0.0, %v991
        %v993 = vpop.f32.mrf.mxu0
        %994 = vdwg.mxu0
        %v995 = vpack.c.bf16 %v992, %v992
        %v996 = vld [vmem:[#allocation7 + $0x4] sm:$0xf]
        %v998 = vsel %vm873, %v995, 0
        %v1001 = vsel %vm915, %v996, 0
        %1003 = vmatpush.bf16.msra.mxu0 0
        %1004 = vmatpush.bf16.msra.mxu0 0
        %1005 = vmatpush.bf16.msra.mxu0 0
        %1006 = vmatpush.bf16.msra.mxu0 0
        %1007 = vmatpush.bf16.msra.mxu0 0
        %1008 = vmatpush.bf16.msra.mxu0 0
        %1009 = vmatpush.bf16.msra.mxu0 0
        %1010 = vmatpush.bf16.msra.mxu0 %v1001
        %1011 = vmatmul.bf16.gmra.mxu0 %v998
        %v1012 = vpop.f32.mrf.mxu0
        %v1013 = vadd.f32 0.0, %v1012
        %v1014 = vpop.f32.mrf.mxu0
        %1015 = vdwg.mxu0
        %v1017 = vsel %vm873, %v932, 0
        %v1020 = vsel %vm915, %v933, 0
        %1022 = vmatpush.bf16.msra.mxu0 0
        %1023 = vmatpush.bf16.msra.mxu0 0
        %1024 = vmatpush.bf16.msra.mxu0 0
        %1025 = vmatpush.bf16.msra.mxu0 0
        %1026 = vmatpush.bf16.msra.mxu0 0
        %1027 = vmatpush.bf16.msra.mxu0 0
        %1028 = vmatpush.bf16.msra.mxu0 0
        %1029 = vmatpush.bf16.msra.mxu0 %v1020
        %1030 = vmatmul.bf16.gmra.mxu0 %v1017
        %v1031 = vpop.f32.mrf.mxu0
        %v1032 = vadd.f32 %v1013, %v1031
        %v1033 = vpop.f32.mrf.mxu0
        %1034 = vdwg.mxu0
        %1035 = vrot.lane.b32.xlu0 %v936, 112
        %v1036 = vpop.permute.xlu0 %1035
        %1037 = vrot.lane.b32.xlu0 %v909, 112
        %v1038 = vpop.permute.xlu0 %1037
        %v1040 = vsel %vm873, %v1036, 0
        %v1043 = vsel %vm873, %v1038, 0
        %1045 = vmatpush.bf16.xpose.msra.mxu0 0
        %1046 = vmatpush.bf16.xpose.msra.mxu0 0
        %1047 = vmatpush.bf16.xpose.msra.mxu0 0
        %1048 = vmatpush.bf16.xpose.msra.mxu0 0
        %1049 = vmatpush.bf16.xpose.msra.mxu0 0
        %1050 = vmatpush.bf16.xpose.msra.mxu0 0
        %1051 = vmatpush.bf16.xpose.msra.mxu0 0
        %1052 = vmatpush.bf16.xpose.msra.mxu0 %v1043
        %1053 = vmatmul.bf16.gmra.mxu0 %v1040
        %v1054 = vpop.f32.mrf.mxu0
        %v1055 = vadd.f32 0.0, %v1054
        %v1056 = vpop.f32.mrf.mxu0
        %1057 = vdwg.mxu0
        %v1058 = vmul.f32 %v1055, 0.35355338
        %v1059 = vsel %vm872, %v1058, -1000000.0
        %v1060 = vsel %vm873, %v1059, -inf
        %1061 = vmax.xlane.f32.xlu0 %v1060
        %v1062 = vpop.xlane.xlu0 %1061
        %v1063 = vsub.f32 %v1059, %v1062
        %v1064 = vmul.f32 %v1063, 1.442695
        %v1065 = vpow.pop %v1064
        %v1066 = vsel %vm873, %v1065, 0.0
        %1067 = vadd.xlane.f32.xlu0 %v1066
        %v1068 = vpop.xlane.xlu0 %1067
        %v1069 = vrcp.pop %v1068
        %v1070 = vmul.f32 %v1065, %v1069
        %v1071 = vpack.c.bf16 %v1070, %v1070
        %1072 = vrot.lane.b32.xlu0 %v909, 80
        %v1073 = vpop.permute.xlu0 %1072
        %v1075 = vsel %vm873, %v1071, 0
        %v1078 = vsel %vm915, %v1073, 0
        %1080 = vmatpush.bf16.msra.mxu0 0
        %1081 = vmatpush.bf16.msra.mxu0 0
        %1082 = vmatpush.bf16.msra.mxu0 0
        %1083 = vmatpush.bf16.msra.mxu0 0
        %1084 = vmatpush.bf16.msra.mxu0 0
        %1085 = vmatpush.bf16.msra.mxu0 0
        %1086 = vmatpush.bf16.msra.mxu0 0
        %1087 = vmatpush.bf16.msra.mxu0 %v1078
        %1088 = vmatmul.bf16.gmra.mxu0 %v1075
        %v1089 = vpop.f32.mrf.mxu0
        %v1090 = vadd.f32 0.0, %v1089
        %v1091 = vpop.f32.mrf.mxu0
        %1092 = vdwg.mxu0
        %v1093 = vpack.c.bf16 %v1090, %v1090
        %v1094 = vld [vmem:[#allocation7 + $0x8] sm:$0xf]
        %v1096 = vsel %vm873, %v1093, 0
        %v1099 = vsel %vm915, %v1094, 0
        %1101 = vmatpush.bf16.msra.mxu0 0
        %1102 = vmatpush.bf16.msra.mxu0 0
        %1103 = vmatpush.bf16.msra.mxu0 0
        %1104 = vmatpush.bf16.msra.mxu0 0
        %1105 = vmatpush.bf16.msra.mxu0 0
        %1106 = vmatpush.bf16.msra.mxu0 0
        %1107 = vmatpush.bf16.msra.mxu0 0
        %1108 = vmatpush.bf16.msra.mxu0 %v1099
        %1109 = vmatmul.bf16.gmra.mxu0 %v1096
        %v1110 = vpop.f32.mrf.mxu0
        %v1111 = vadd.f32 0.0, %v1110
        %v1112 = vpop.f32.mrf.mxu0
        %1113 = vdwg.mxu0
        %v1114 = vadd.f32 %v1032, %v1111
        %1115 = vrot.lane.b32.xlu0 %v936, 104
        %v1116 = vpop.permute.xlu0 %1115
        %1117 = vrot.lane.b32.xlu0 %v909, 104
        %v1118 = vpop.permute.xlu0 %1117
        %v1120 = vsel %vm873, %v1116, 0
        %v1123 = vsel %vm873, %v1118, 0
        %1125 = vmatpush.bf16.xpose.msra.mxu0 0
        %1126 = vmatpush.bf16.xpose.msra.mxu0 0
        %1127 = vmatpush.bf16.xpose.msra.mxu0 0
        %1128 = vmatpush.bf16.xpose.msra.mxu0 0
        %1129 = vmatpush.bf16.xpose.msra.mxu0 0
        %1130 = vmatpush.bf16.xpose.msra.mxu0 0
        %1131 = vmatpush.bf16.xpose.msra.mxu0 0
        %1132 = vmatpush.bf16.xpose.msra.mxu0 %v1123
        %1133 = vmatmul.bf16.gmra.mxu0 %v1120
        %v1134 = vpop.f32.mrf.mxu0
        %v1135 = vadd.f32 0.0, %v1134
        %v1136 = vpop.f32.mrf.mxu0
        %1137 = vdwg.mxu0
        %v1138 = vmul.f32 %v1135, 0.35355338
        %v1139 = vsel %vm872, %v1138, -1000000.0
        %v1140 = vsel %vm873, %v1139, -inf
        %1141 = vmax.xlane.f32.xlu0 %v1140
        %v1142 = vpop.xlane.xlu0 %1141
        %v1143 = vsub.f32 %v1139, %v1142
        %v1144 = vmul.f32 %v1143, 1.442695
        %v1145 = vpow.pop %v1144
        %v1146 = vsel %vm873, %v1145, 0.0
        %1147 = vadd.xlane.f32.xlu0 %v1146
        %v1148 = vpop.xlane.xlu0 %1147
        %v1149 = vrcp.pop %v1148
        %v1150 = vmul.f32 %v1145, %v1149
        %v1151 = vpack.c.bf16 %v1150, %v1150
        %1152 = vrot.lane.b32.xlu0 %v909, 72
        %v1153 = vpop.permute.xlu0 %1152
        %v1155 = vsel %vm873, %v1151, 0
        %v1158 = vsel %vm915, %v1153, 0
        %1160 = vmatpush.bf16.msra.mxu0 0
        %1161 = vmatpush.bf16.msra.mxu0 0
        %1162 = vmatpush.bf16.msra.mxu0 0
        %1163 = vmatpush.bf16.msra.mxu0 0
        %1164 = vmatpush.bf16.msra.mxu0 0
        %1165 = vmatpush.bf16.msra.mxu0 0
        %1166 = vmatpush.bf16.msra.mxu0 0
        %1167 = vmatpush.bf16.msra.mxu0 %v1158
        %1168 = vmatmul.bf16.gmra.mxu0 %v1155
        %v1169 = vpop.f32.mrf.mxu0
        %v1170 = vadd.f32 0.0, %v1169
        %v1171 = vpop.f32.mrf.mxu0
        %1172 = vdwg.mxu0
        %v1173 = vpack.c.bf16 %v1170, %v1170
        %v1174 = vld [vmem:[#allocation7 + $0xc] sm:$0xf]
        %v1176 = vsel %vm873, %v1173, 0
        %v1179 = vsel %vm915, %v1174, 0
        %1181 = vmatpush.bf16.msra.mxu0 0
        %1182 = vmatpush.bf16.msra.mxu0 0
        %1183 = vmatpush.bf16.msra.mxu0 0
        %1184 = vmatpush.bf16.msra.mxu0 0
        %1185 = vmatpush.bf16.msra.mxu0 0
        %1186 = vmatpush.bf16.msra.mxu0 0
        %1187 = vmatpush.bf16.msra.mxu0 0
        %1188 = vmatpush.bf16.msra.mxu0 %v1179
        %1189 = vmatmul.bf16.gmra.mxu0 %v1176
        %v1190 = vpop.f32.mrf.mxu0
        %v1191 = vadd.f32 0.0, %v1190
        %v1192 = vpop.f32.mrf.mxu0
        %1193 = vdwg.mxu0
        %v1194 = vadd.f32 %v1114, %v1191
        %v1195 = vadd.f32 %v723, %v1194
        %v1196 = vld [vmem:[%s11] sm:$0x1]
        %v1198 = vperm.slane %v1196, 0
        %v1200 = vadd.f32 %v1195, %v1198
        %v1201 = vld [vmem:[%s12] sm:$0x1]
        %v1202 = vld [vmem:[%s13] sm:$0x1]
        %v1203 = vsel %vm726, %v1200, 0.0
        %1204 = vadd.xlane.f32.xlu0 %v1203
        %v1205 = vpop.xlane.xlu0 %1204
        %v1206 = vmul.f32 %v1205, %v736
        %v1207 = vsub.f32 %v1200, %v1206
        %v1208 = vmul.f32 %v1207, %v1207
        %v1209 = vsel %vm726, %v1208, 0.0
        %1210 = vadd.xlane.f32.xlu0 %v1209
        %v1211 = vpop.xlane.xlu0 %1210
        %v1212 = vmul.f32 %v1211, %v736
        %v1213 = vadd.f32 %v1212, 1e-05
        %v1214 = vrsqrt.pop %v1213
        %v1215 = vmul.f32 %v1214, %v1213
        %v1216 = vmul.f32 %v1215, %v1214
        %v1217 = vmul.f32 0.5, %v1216
        %v1218 = vsub.f32 1.5, %v1217
        %v1219 = vmul.f32 %v1214, %v1218
        %vm1220 = vweird.f32 %v1213
        %vm1221 = vweird.f32 %v1214
        %vm1222 = vmor %vm1220, %vm1221
        %v1223 = vsel %vm1222, %v1214, %v1219
        %v1224 = vmul.f32 %v1207, %v1223
        %v1226 = vperm.slane %v1201, 0
        %v1228 = vmul.f32 %v1224, %v1226
        %v1230 = vperm.slane %v1202, 0
        %v1232 = vadd.f32 %v1228, %v1230
        %v1233 = vpack.c.bf16 %v1232, %v1232
        %v1234 = vld [vmem:[#allocation8] sm:$0xf]
        %v1235 = vld [vmem:[#allocation8 + $0x4] sm:$0xf]
        %v1236 = vld [vmem:[#allocation8 + $0x8] sm:$0xf]
        %v1237 = vld [vmem:[#allocation8 + $0xc] sm:$0xf]
        %v1238 = vld [vmem:[%s15] sm:$0x1]
        %v1240 = vperm.slane %v1238, 0
        %v1246 = vunpack.c.l.b16 %v1234
        %v1247 = vunpack.c.l.b16 %v1235
        %v1248 = vunpack.c.l.b16 %v1236
        %v1249 = vunpack.c.l.b16 %v1237
        %v1250 = vpack.c.b16 %v1247, %v1246
        %v1251 = vpack.c.b16 %v1249, %v1248
        %v1255 = vsel %vm726, %v1233, 0
        %1257 = vmatpush.bf16.msra.mxu0 0
        %1258 = vmatpush.bf16.msra.mxu0 0
        %1259 = vmatpush.bf16.msra.mxu0 0
        %1260 = vmatpush.bf16.msra.mxu0 0
        %1261 = vmatpush.bf16.msra.mxu0 0
        %1262 = vmatpush.bf16.msra.mxu0 0
        %1263 = vmatpush.bf16.msra.mxu0 %v1251
        %1264 = vmatpush.bf16.msra.mxu0 %v1250
        %1265 = vmatmul.bf16.gmra.mxu0 %v1255
        %v1266 = vpop.f32.mrf.mxu0
        %v1267 = vadd.f32 %v1240, %v1266
        %v1268 = vpop.f32.mrf.mxu0
        %1269 = vdwg.mxu0
        %v1270 = vmul.f32 %v1267, 0.5
        %v1271 = vmul.f32 %v1267, 0.70710677
        %v1272 = vmul.f32 %v1271, %v1271
        %v1273 = vmin.f32 16.0, %v1272
        %v1274 = vmul.f32 %v1273, 2.1237322e-06
        %v1275 = vadd.f32 %v1274, 0.00028619796
        %v1276 = vmul.f32 %v1273, %v1275
        %v1277 = vadd.f32 %v1276, 0.0036580483
        %v1278 = vmul.f32 %v1273, %v1277
        %v1279 = vadd.f32 %v1278, 0.05243302
        %v1280 = vmul.f32 %v1273, %v1279
        %v1281 = vadd.f32 %v1280, 0.18741608
        %v1282 = vmul.f32 %v1273, %v1281
        %v1283 = vadd.f32 %v1282, 1.1283791
        %v1284 = vmul.f32 %v1271, %v1283
        %v1285 = vmul.f32 %v1273, 3.8918573e-05
        %v1286 = vadd.f32 %v1285, 0.001143296
        %v1287 = vmul.f32 %v1273, %v1286
        %v1288 = vadd.f32 %v1287, 0.014752088
        %v1289 = vmul.f32 %v1273, %v1288
        %v1290 = vadd.f32 %v1289, 0.112945676
        %v1291 = vmul.f32 %v1273, %v1290
        %v1292 = vadd.f32 %v1291, 0.4994258
        %v1293 = vmul.f32 %v1273, %v1292
        %v1294 = vadd.f32 %v1293, 1.0
        %v1295 = vrcp.pop %v1294
        %v1296 = vmul.f32 %v1294, %v1295
        %v1297 = vsub.f32 1.0, %v1296
        %v1298 = vmul.f32 %v1295, %v1297
        %v1299 = vadd.f32 %v1295, %v1298
        %vm1300 = vweird.f32 %v1294
        %vm1301 = vweird.f32 %v1295
        %vm1302 = vmor %vm1300, %vm1301
        %v1303 = vsel %vm1302, %v1295, %v1299
        %v1304 = vand.u32 2147483647, %v1294
        %vm1305 = vcmp.eq.f32.partialorder %v1304, 8.507059e+37
        %v1306 = vand.u32 %v1294, 2147483648
        %v1307 = vor.u32 1.1754944e-38, %v1306
        %v1308 = vsel %vm1305, %v1307, %v1303
        %v1309 = vmul.f32 %v1284, %v1308
        %v1310 = vmin.f32 %v1309, 1.0
        %v1311 = vmax.f32 %v1310, -1.0
        %v1312 = vadd.f32 %v1311, 1.0
        %v1313 = vmul.f32 %v1270, %v1312
        %v1314 = vpack.c.bf16 %v1313, %v1313
        %v1315 = vld [vmem:[%s16] sm:$0xf]
        %v1316 = vld [vmem:[%s16 + $0x4] sm:$0xf]
        %v1317 = vld [vmem:[%s16 + $0x8] sm:$0xf]
        %v1318 = vld [vmem:[%s16 + $0xc] sm:$0xf]
        %v1319 = vld [vmem:[%s16 + $0x10] sm:$0xf]
        %v1320 = vld [vmem:[%s16 + $0x14] sm:$0xf]
        %v1321 = vld [vmem:[%s16 + $0x18] sm:$0xf]
        %v1322 = vld [vmem:[%s16 + $0x1c] sm:$0xf]
        %v1331 = vunpack.c.l.b16 %v1315
        %v1332 = vunpack.c.l.b16 %v1316
        %v1333 = vunpack.c.l.b16 %v1317
        %v1334 = vunpack.c.l.b16 %v1318
        %v1335 = vunpack.c.l.b16 %v1319
        %v1336 = vunpack.c.l.b16 %v1320
        %v1337 = vunpack.c.l.b16 %v1321
        %v1338 = vunpack.c.l.b16 %v1322
        %v1339 = vpack.c.b16 %v1332, %v1331
        %v1340 = vpack.c.b16 %v1334, %v1333
        %v1341 = vpack.c.b16 %v1336, %v1335
        %v1342 = vpack.c.b16 %v1338, %v1337
        %vm1347 = vcmask 523264
        %v1349 = vsel %vm1347, %v1314, 0
        %1351 = vmatpush.bf16.msra.mxu0 0
        %1352 = vmatpush.bf16.msra.mxu0 0
        %1353 = vmatpush.bf16.msra.mxu0 0
        %1354 = vmatpush.bf16.msra.mxu0 0
        %1355 = vmatpush.bf16.msra.mxu0 %v1342
        %1356 = vmatpush.bf16.msra.mxu0 %v1341
        %1357 = vmatpush.bf16.msra.mxu0 %v1340
        %1358 = vmatpush.bf16.msra.mxu0 %v1339
        %1359 = vmatmul.bf16.gmra.mxu0 %v1349
        %v1360 = vpop.f32.mrf.mxu0
        %v1361 = vadd.f32 0.0, %v1360
        %v1362 = vpop.f32.mrf.mxu0
        %1363 = vdwg.mxu0
        %v1364 = vadd.f32 %v1200, %v1361
        %v1365 = vld [vmem:[%s17] sm:$0x1]
        %v1367 = vperm.slane %v1365, 0
        %v1369 = vadd.f32 %v1364, %v1367
        %1370 = vst.msk [vmem:[%s700] sm:$0xff] %vm726, %v1369
        %s1371 = sand.u32 %s459, 1
        %s1372 = scalar_lea.sflag [#allocation4], %s1371
        %s1373 = sand.u32 %s459, 1
        %s1374 = smul.addr %s1373, 8
        %s1375 = scalar_lea.vmem [#allocation10], %s1374
        // Predicated region
        $region109: #{tpu_custom_call.1} parent=91 // pred_check
          %p1376 = pneg %p469
        $region110: #{tpu_custom_call.1} parent=91 // pred_check_branch
          %1378 = sbr.rel (%p1376) target = $region112
        $region111: #{tpu_custom_call.1} parent=91 // pred_region
          %1380 = vsyncadd %s1372, 0
          %s1381 = sadd.s32 %s40, %s39
          %s1382 = smul.addr %s1381, 8
          %s1383 = scalar_lea.hbm %s18, %s1382
          %s1385 = sshll.u32 %s1375, 4
          %s1386 = int_to_ptr.vmem [resolvable:$true] %s1385
          %s1387 = sshll.u32 %s1383, 4
          %s1388 = int_to_ptr.hbm [resolvable:$true] %s1387
          %1390 = dma.vmem_to_hbm [thread:$0]  %s1386, 128, %s1388, %s1372
        $region112: #{tpu_custom_call.1} parent=91 // pred_fallthru
          _
      $region92: #{tpu_custom_call.1} parent=5 // pred_fallthru
        _
      %p1391 = scmp.le.s32.totalorder 2, %s30
      // Predicated region
      $region113: #{tpu_custom_call.1} parent=5 // pred_check
        %p1392 = pneg %p1391
      $region114: #{tpu_custom_call.1} parent=5 // pred_check_branch
        %1394 = sbr.rel (%p1392) target = $region116
      $region115: #{tpu_custom_call.1} parent=5 // pred_region
        %s1395 = ssub.s32 %s30, 2
        // Predicated region
        $region117: #{tpu_custom_call.1} parent=115 // pred_check
          %p1396 = pneg %p475
        $region118: #{tpu_custom_call.1} parent=115 // pred_check_branch
          %1398 = sbr.rel (%p1396) target = $region120
        $region119: #{tpu_custom_call.1} parent=115 // pred_region
          %s1399 = sand.u32 %s460, 1
          %s1400 = scalar_lea.sflag [#allocation4], %s1399
          %s1401 = sand.u32 %s460, 1
          %s1402 = smul.addr %s1401, 8
          %s1403 = scalar_lea.vmem [#allocation10], %s1402
          %1405 = dma.done %s1400, 128
        $region120: #{tpu_custom_call.1} parent=115 // pred_fallthru
          _
      $region116: #{tpu_custom_call.1} parent=5 // pred_fallthru
        _
    $region6: #{tpu_custom_call.1} parent=1 // loop_footer
      %s34 = sadd.s32 1, %s30
    $region7: #{tpu_custom_call.1} parent=1 // loop_footer_branch
      %29 = sbr.rel target = $region3
    $region8: #{tpu_custom_call.1} parent=1 // loop_exit
      _
    %1406 = vsyncpa [#allocation3], 1
    %s1407 = scalar_lea.sflag [#allocation3], 1
    %1408 = vsyncpa %s1407, 1
    %1409 = vsyncpa [#allocation6], 1
    %1410 = vsyncpa [#allocation9], 1
    %1411 = vsyncpa [#allocation4], 1
    %s1412 = scalar_lea.sflag [#allocation4], 1
    %1413 = vsyncpa %s1412, 1

</llo_original>
